<compile_context>
chip_gen: v7x
topology: tpu7x:2x2x1
jax: 0.10.0
libtpu: 0.0.40
codegen_flags: <defaults>
</compile_context>

<pallas_src>
import functools

import jax
import jax.numpy as jnp
from jax.experimental import pallas as pl
from jax.experimental.pallas import tpu as pltpu


def _spatial_attention_kernel(x_ref, wv_ref, o_ref, p_ref, *, H, W, K, bt):
    """One batch chunk.

    x_ref : (bt, C, H, W)          VMEM   unpadded input chunk
    wv_ref: (K*K, bt*2*Wp)     f32 VMEM   per-tap two-segment weight rows
    o_ref : (bt, 1, H, W)      f32 VMEM
    p_ref : (Hp, bt*2*Wp+K-1)  f32 VMEM   scratch: packed zero-padded avg|max maps
    """
    pad = K // 2
    Wp = W + K - 1
    Lout = bt * 2 * Wp

    x = x_ref[...].astype(jnp.float32)            # (bt, C, H, W)
    c = x.shape[1]
    # Channel reductions over a leading axis -> pure VPU, no cross-lane work.
    avg = jnp.sum(x, axis=1) * (1.0 / c)          # (bt, H, W) channel mean
    mx = jnp.max(x, axis=1)                       # (bt, H, W) channel max
    # TODO(synk): for production C (>=128) compute the mean on the MXU as a
    # ones-row (1,C)@(C,H*W) jnp.dot instead of the VPU sum; not worth it at C=4.

    # In-kernel zero padding + lane packing (replaces the old wrapper-side jnp.pad):
    #   lanes [b*2Wp,    b*2Wp+Wp)  = zero-padded mean map of batch item b
    #   lanes [b*2Wp+Wp, b*2Wp+2Wp) = zero-padded max  map of batch item b
    # plus K-1 trailing zero lanes so the per-kx lane slice below never reads OOB.
    p_ref[...] = jnp.zeros_like(p_ref)
    for b in range(bt):
        base = b * 2 * Wp
        p_ref[pad:pad + H, base + pad:base + pad + W] = avg[b]
        p_ref[pad:pad + H, base + Wp + pad:base + Wp + pad + W] = mx[b]

    packed = p_ref[...]                           # (Hp, Lout + K - 1)

    # 7x7 "same" conv, fully unrolled.  kx is the OUTER loop: one lane shift per kx
    # (K total, vs. 98 shifted slices before); the inner ky loop only takes cheap
    # sublane-offset windows.  Each FMA covers the avg AND max maps of every batch
    # item in the chunk via the two-segment weight row.
    acc = jnp.zeros((H, Lout), jnp.float32)
    for kx in range(K):
        shifted = packed[:, kx:kx + Lout]         # (Hp, Lout) -- the one lane shift
        for ky in range(K):
            t = ky * K + kx
            wrow = wv_ref[t:t + 1, :]             # (1, Lout): w_avg on avg lanes, w_max on max lanes
            acc = acc + wrow * shifted[ky:ky + H, :]

    # Combine the avg/max segments and apply sigmoid (exp/recip ride the EUP slot).
    for b in range(bt):
        base = b * 2 * Wp
        y = acc[:, base:base + W] + acc[:, base + Wp:base + Wp + W]   # (H, W)
        o_ref[b, 0, :, :] = jax.nn.sigmoid(y).astype(o_ref.dtype)
    # TODO(synk): at production H*W, present the output as a lane-dense slab
    # (last dim a multiple of 128) so stores are unmasked vst instead of vst.msk.


def spatial_attention(x: jax.Array, conv_weight: jax.Array, *, kernel_size: int = 7) -> jax.Array:
    """x: (B, C, H, W), conv_weight: (1, 2, K, K) f32  ->  (B, 1, H, W) f32."""
    B, C, H, W = x.shape
    K = kernel_size
    assert conv_weight.shape == (1, 2, K, K), conv_weight.shape
    Hp, Wp = H + K - 1, W + K - 1

    # Batch chunking: keep two parallel grid blocks when possible so both v7x
    # TensorCores get work; batch items within a chunk are packed along the lane
    # axis inside the kernel so vregs fill toward 128 lanes.
    nb = 2 if (B >= 2 and B % 2 == 0) else 1
    bt = B // nb
    Lout = bt * 2 * Wp          # packed output lane width per chunk
    Lp = Lout + (K - 1)         # + trailing zero gap so per-kx lane slices stay in bounds

    # Per-tap "two-segment" weight rows, built once outside the kernel:
    # row t = ky*K+kx holds w[avg][ky,kx] on each batch item's avg output lanes and
    # w[max][ky,kx] on its max output lanes, zero elsewhere.
    taps = conv_weight.astype(jnp.float32).reshape(2, K * K)
    seg = jnp.zeros((K * K, 2 * Wp), jnp.float32)
    seg = seg.at[:, 0:W].set(taps[0][:, None])
    seg = seg.at[:, Wp:Wp + W].set(taps[1][:, None])
    wv = jnp.tile(seg, (1, bt))                   # (K*K, Lout)

    kernel = functools.partial(_spatial_attention_kernel, H=H, W=W, K=K, bt=bt)

    # TODO(synk): for production C/H/W, add a channel-chunk grid axis marked
    # "arbitrary" (running sum/max scratch accumulators) and spatial tiles with a
    # K//2 halo; size tiles per generation (v5e 16 MiB scoped VMEM, v7x 64 MiB
    # physical) via pltpu.CompilerParams(vmem_limit_bytes=...).
    return pl.pallas_call(
        kernel,
        out_shape=jax.ShapeDtypeStruct((B, 1, H, W), jnp.float32),
        grid=(nb,),
        in_specs=[
            pl.BlockSpec((bt, C, H, W), lambda i: (i, 0, 0, 0)),   # unpadded input chunk
            pl.BlockSpec((K * K, Lout), lambda i: (0, 0)),         # weight rows (constant block)
        ],
        out_specs=pl.BlockSpec((bt, 1, H, W), lambda i: (i, 0, 0, 0)),
        scratch_shapes=[pltpu.VMEM((Hp, Lp), jnp.float32)],
        compiler_params=pltpu.CompilerParams(dimension_semantics=("parallel",)),
    )(x, wv)


def _reference(x, conv_weight):
    avg = jnp.mean(x, axis=1, keepdims=True)
    mx = jnp.max(x, axis=1, keepdims=True)
    cat = jnp.concatenate([avg, mx], axis=1)
    pad = conv_weight.shape[-1] // 2
    y = jax.lax.conv_general_dilated(
        cat, conv_weight, window_strides=(1, 1),
        padding=((pad, pad), (pad, pad)),
        dimension_numbers=("NCHW", "OIHW", "NCHW"))
    return jax.nn.sigmoid(y)


if __name__ == "__main__":
    B, C, H, W, K = 2, 4, 16, 16, 7
    key = jax.random.PRNGKey(0)
    key_x, key_w = jax.random.split(key)
    x = jax.random.normal(key_x, (B, C, H, W), dtype=jnp.float32)
    w = 0.1 * jax.random.normal(key_w, (1, 2, K, K), dtype=jnp.float32)

    out = spatial_attention(x, w, kernel_size=K)
    out = jax.block_until_ready(out)

    ref = _reference(x, w)
    assert out.shape == (B, 1, H, W), out.shape
    max_err = float(jnp.max(jnp.abs(out - ref)))
    assert jnp.allclose(out, ref, atol=1e-5, rtol=1e-5), max_err

    print("KERNEL_OK")
</pallas_src>

<mosaic_0001>
module attributes {stable_mosaic.version = 11 : i64} {
  func.func @_spatial_attention_kernel(%arg0: i32, %arg1: memref<1x4x16x16xf32, #tpu.memory_space<vmem>>, %arg2: memref<49x44xf32, #tpu.memory_space<vmem>>, %arg3: memref<1x1x16x16xf32, #tpu.memory_space<vmem>>, %arg4: memref<22x50xf32, #tpu.memory_space<vmem>>) attributes {dimension_semantics = [#tpu.dimension_semantics<parallel>], iteration_bounds = array<i64: 2>, scalar_prefetch = 0 : i64, scratch_operands = 1 : i64, tpu.core_type = #tpu.core_type<tc>, window_params = [{transform_indices = @transform_0, window_bounds = array<i64: 1, 4, 16, 16>}, {pipeline_mode = #tpu.pipeline_mode<synchronous>, transform_indices = @transform_1, window_bounds = array<i64: 49, 44>}, {transform_indices = @transform_2, window_bounds = array<i64: 1, 1, 16, 16>}]} {
    %c0 = arith.constant 0 : index
    %c0_0 = arith.constant 0 : index
    %c0_1 = arith.constant 0 : index
    %c0_2 = arith.constant 0 : index
    %0 = vector.load %arg1[%c0, %c0_0, %c0_1, %c0_2] : memref<1x4x16x16xf32, #tpu.memory_space<vmem>>, vector<1x4x16x16xf32>
    %cst = arith.constant dense<0.000000e+00> : vector<1x16x16xf32>
    %1 = vector.multi_reduction <add>, %0, %cst [1] : vector<1x4x16x16xf32> to vector<1x16x16xf32>
    %cst_3 = arith.constant 2.500000e-01 : f32
    %2 = vector.broadcast %cst_3 : f32 to vector<1x16x16xf32>
    %3 = arith.mulf %1, %2 : vector<1x16x16xf32>
    %cst_4 = arith.constant dense<0xFF800000> : vector<1x16x16xf32>
    %4 = vector.multi_reduction <maximumf>, %0, %cst_4 [1] : vector<1x4x16x16xf32> to vector<1x16x16xf32>
    %cst_5 = arith.constant 0.000000e+00 : f32
    %5 = vector.broadcast %cst_5 : f32 to vector<22x50xf32>
    %c0_6 = arith.constant 0 : index
    %c0_7 = arith.constant 0 : index
    %6 = vector.load %arg4[%c0_6, %c0_7] : memref<22x50xf32, #tpu.memory_space<vmem>>, vector<22x50xf32>
    tpu.vector_store %arg4[%c0_6, %c0_7], %5 {strides = array<i32>} : memref<22x50xf32, #tpu.memory_space<vmem>>, vector<22x50xf32>,
    %7 = vector.shape_cast %3 : vector<1x16x16xf32> to vector<16x16xf32>
    %c3 = arith.constant 3 : index
    %c3_8 = arith.constant 3 : index
    %8 = vector.load %arg4[%c3, %c3_8] : memref<22x50xf32, #tpu.memory_space<vmem>>, vector<16x16xf32>
    tpu.vector_store %arg4[%c3, %c3_8], %7 {strides = array<i32>} : memref<22x50xf32, #tpu.memory_space<vmem>>, vector<16x16xf32>,
    %9 = vector.shape_cast %4 : vector<1x16x16xf32> to vector<16x16xf32>
    %c3_9 = arith.constant 3 : index
    %c25 = arith.constant 25 : index
    %10 = vector.load %arg4[%c3_9, %c25] : memref<22x50xf32, #tpu.memory_space<vmem>>, vector<16x16xf32>
    tpu.vector_store %arg4[%c3_9, %c25], %9 {strides = array<i32>} : memref<22x50xf32, #tpu.memory_space<vmem>>, vector<16x16xf32>,
    %c0_10 = arith.constant 0 : index
    %c0_11 = arith.constant 0 : index
    %11 = vector.load %arg4[%c0_10, %c0_11] : memref<22x50xf32, #tpu.memory_space<vmem>>, vector<22x50xf32>
    %cst_12 = arith.constant 0.000000e+00 : f32
    %12 = vector.broadcast %cst_12 : f32 to vector<16x44xf32>
    %13 = vector.extract_strided_slice %11 {offsets = [0, 0], sizes = [22, 44], strides = [1, 1]} : vector<22x50xf32> to vector<22x44xf32>
    %c0_13 = arith.constant 0 : index
    %c0_14 = arith.constant 0 : index
    %14 = vector.load %arg2[%c0_13, %c0_14] : memref<49x44xf32, #tpu.memory_space<vmem>>, vector<1x44xf32>
    %15 = vector.extract_strided_slice %13 {offsets = [0, 0], sizes = [16, 44], strides = [1, 1]} : vector<22x44xf32> to vector<16x44xf32>
    %16 = vector.broadcast %14 : vector<1x44xf32> to vector<16x44xf32>
    %17 = arith.mulf %16, %15 : vector<16x44xf32>
    %18 = arith.addf %12, %17 : vector<16x44xf32>
    %c7 = arith.constant 7 : index
    %c0_15 = arith.constant 0 : index
    %19 = vector.load %arg2[%c7, %c0_15] : memref<49x44xf32, #tpu.memory_space<vmem>>, vector<1x44xf32>
    %20 = vector.extract_strided_slice %13 {offsets = [1, 0], sizes = [16, 44], strides = [1, 1]} : vector<22x44xf32> to vector<16x44xf32>
    %21 = vector.broadcast %19 : vector<1x44xf32> to vector<16x44xf32>
    %22 = arith.mulf %21, %20 : vector<16x44xf32>
    %23 = arith.addf %18, %22 : vector<16x44xf32>
    %c14 = arith.constant 14 : index
    %c0_16 = arith.constant 0 : index
    %24 = vector.load %arg2[%c14, %c0_16] : memref<49x44xf32, #tpu.memory_space<vmem>>, vector<1x44xf32>
    %25 = vector.extract_strided_slice %13 {offsets = [2, 0], sizes = [16, 44], strides = [1, 1]} : vector<22x44xf32> to vector<16x44xf32>
    %26 = vector.broadcast %24 : vector<1x44xf32> to vector<16x44xf32>
    %27 = arith.mulf %26, %25 : vector<16x44xf32>
    %28 = arith.addf %23, %27 : vector<16x44xf32>
    %c21 = arith.constant 21 : index
    %c0_17 = arith.constant 0 : index
    %29 = vector.load %arg2[%c21, %c0_17] : memref<49x44xf32, #tpu.memory_space<vmem>>, vector<1x44xf32>
    %30 = vector.extract_strided_slice %13 {offsets = [3, 0], sizes = [16, 44], strides = [1, 1]} : vector<22x44xf32> to vector<16x44xf32>
    %31 = vector.broadcast %29 : vector<1x44xf32> to vector<16x44xf32>
    %32 = arith.mulf %31, %30 : vector<16x44xf32>
    %33 = arith.addf %28, %32 : vector<16x44xf32>
    %c28 = arith.constant 28 : index
    %c0_18 = arith.constant 0 : index
    %34 = vector.load %arg2[%c28, %c0_18] : memref<49x44xf32, #tpu.memory_space<vmem>>, vector<1x44xf32>
    %35 = vector.extract_strided_slice %13 {offsets = [4, 0], sizes = [16, 44], strides = [1, 1]} : vector<22x44xf32> to vector<16x44xf32>
    %36 = vector.broadcast %34 : vector<1x44xf32> to vector<16x44xf32>
    %37 = arith.mulf %36, %35 : vector<16x44xf32>
    %38 = arith.addf %33, %37 : vector<16x44xf32>
    %c35 = arith.constant 35 : index
    %c0_19 = arith.constant 0 : index
    %39 = vector.load %arg2[%c35, %c0_19] : memref<49x44xf32, #tpu.memory_space<vmem>>, vector<1x44xf32>
    %40 = vector.extract_strided_slice %13 {offsets = [5, 0], sizes = [16, 44], strides = [1, 1]} : vector<22x44xf32> to vector<16x44xf32>
    %41 = vector.broadcast %39 : vector<1x44xf32> to vector<16x44xf32>
    %42 = arith.mulf %41, %40 : vector<16x44xf32>
    %43 = arith.addf %38, %42 : vector<16x44xf32>
    %c42 = arith.constant 42 : index
    %c0_20 = arith.constant 0 : index
    %44 = vector.load %arg2[%c42, %c0_20] : memref<49x44xf32, #tpu.memory_space<vmem>>, vector<1x44xf32>
    %45 = vector.extract_strided_slice %13 {offsets = [6, 0], sizes = [16, 44], strides = [1, 1]} : vector<22x44xf32> to vector<16x44xf32>
    %46 = vector.broadcast %44 : vector<1x44xf32> to vector<16x44xf32>
    %47 = arith.mulf %46, %45 : vector<16x44xf32>
    %48 = arith.addf %43, %47 : vector<16x44xf32>
    %49 = vector.extract_strided_slice %11 {offsets = [0, 1], sizes = [22, 44], strides = [1, 1]} : vector<22x50xf32> to vector<22x44xf32>
    %c1 = arith.constant 1 : index
    %c0_21 = arith.constant 0 : index
    %50 = vector.load %arg2[%c1, %c0_21] : memref<49x44xf32, #tpu.memory_space<vmem>>, vector<1x44xf32>
    %51 = vector.extract_strided_slice %49 {offsets = [0, 0], sizes = [16, 44], strides = [1, 1]} : vector<22x44xf32> to vector<16x44xf32>
    %52 = vector.broadcast %50 : vector<1x44xf32> to vector<16x44xf32>
    %53 = arith.mulf %52, %51 : vector<16x44xf32>
    %54 = arith.addf %48, %53 : vector<16x44xf32>
    %c8 = arith.constant 8 : index
    %c0_22 = arith.constant 0 : index
    %55 = vector.load %arg2[%c8, %c0_22] : memref<49x44xf32, #tpu.memory_space<vmem>>, vector<1x44xf32>
    %56 = vector.extract_strided_slice %49 {offsets = [1, 0], sizes = [16, 44], strides = [1, 1]} : vector<22x44xf32> to vector<16x44xf32>
    %57 = vector.broadcast %55 : vector<1x44xf32> to vector<16x44xf32>
    %58 = arith.mulf %57, %56 : vector<16x44xf32>
    %59 = arith.addf %54, %58 : vector<16x44xf32>
    %c15 = arith.constant 15 : index
    %c0_23 = arith.constant 0 : index
    %60 = vector.load %arg2[%c15, %c0_23] : memref<49x44xf32, #tpu.memory_space<vmem>>, vector<1x44xf32>
    %61 = vector.extract_strided_slice %49 {offsets = [2, 0], sizes = [16, 44], strides = [1, 1]} : vector<22x44xf32> to vector<16x44xf32>
    %62 = vector.broadcast %60 : vector<1x44xf32> to vector<16x44xf32>
    %63 = arith.mulf %62, %61 : vector<16x44xf32>
    %64 = arith.addf %59, %63 : vector<16x44xf32>
    %c22 = arith.constant 22 : index
    %c0_24 = arith.constant 0 : index
    %65 = vector.load %arg2[%c22, %c0_24] : memref<49x44xf32, #tpu.memory_space<vmem>>, vector<1x44xf32>
    %66 = vector.extract_strided_slice %49 {offsets = [3, 0], sizes = [16, 44], strides = [1, 1]} : vector<22x44xf32> to vector<16x44xf32>
    %67 = vector.broadcast %65 : vector<1x44xf32> to vector<16x44xf32>
    %68 = arith.mulf %67, %66 : vector<16x44xf32>
    %69 = arith.addf %64, %68 : vector<16x44xf32>
    %c29 = arith.constant 29 : index
    %c0_25 = arith.constant 0 : index
    %70 = vector.load %arg2[%c29, %c0_25] : memref<49x44xf32, #tpu.memory_space<vmem>>, vector<1x44xf32>
    %71 = vector.extract_strided_slice %49 {offsets = [4, 0], sizes = [16, 44], strides = [1, 1]} : vector<22x44xf32> to vector<16x44xf32>
    %72 = vector.broadcast %70 : vector<1x44xf32> to vector<16x44xf32>
    %73 = arith.mulf %72, %71 : vector<16x44xf32>
    %74 = arith.addf %69, %73 : vector<16x44xf32>
    %c36 = arith.constant 36 : index
    %c0_26 = arith.constant 0 : index
    %75 = vector.load %arg2[%c36, %c0_26] : memref<49x44xf32, #tpu.memory_space<vmem>>, vector<1x44xf32>
    %76 = vector.extract_strided_slice %49 {offsets = [5, 0], sizes = [16, 44], strides = [1, 1]} : vector<22x44xf32> to vector<16x44xf32>
    %77 = vector.broadcast %75 : vector<1x44xf32> to vector<16x44xf32>
    %78 = arith.mulf %77, %76 : vector<16x44xf32>
    %79 = arith.addf %74, %78 : vector<16x44xf32>
    %c43 = arith.constant 43 : index
    %c0_27 = arith.constant 0 : index
    %80 = vector.load %arg2[%c43, %c0_27] : memref<49x44xf32, #tpu.memory_space<vmem>>, vector<1x44xf32>
    %81 = vector.extract_strided_slice %49 {offsets = [6, 0], sizes = [16, 44], strides = [1, 1]} : vector<22x44xf32> to vector<16x44xf32>
    %82 = vector.broadcast %80 : vector<1x44xf32> to vector<16x44xf32>
    %83 = arith.mulf %82, %81 : vector<16x44xf32>
    %84 = arith.addf %79, %83 : vector<16x44xf32>
    %85 = vector.extract_strided_slice %11 {offsets = [0, 2], sizes = [22, 44], strides = [1, 1]} : vector<22x50xf32> to vector<22x44xf32>
    %c2 = arith.constant 2 : index
    %c0_28 = arith.constant 0 : index
    %86 = vector.load %arg2[%c2, %c0_28] : memref<49x44xf32, #tpu.memory_space<vmem>>, vector<1x44xf32>
    %87 = vector.extract_strided_slice %85 {offsets = [0, 0], sizes = [16, 44], strides = [1, 1]} : vector<22x44xf32> to vector<16x44xf32>
    %88 = vector.broadcast %86 : vector<1x44xf32> to vector<16x44xf32>
    %89 = arith.mulf %88, %87 : vector<16x44xf32>
    %90 = arith.addf %84, %89 : vector<16x44xf32>
    %c9 = arith.constant 9 : index
    %c0_29 = arith.constant 0 : index
    %91 = vector.load %arg2[%c9, %c0_29] : memref<49x44xf32, #tpu.memory_space<vmem>>, vector<1x44xf32>
    %92 = vector.extract_strided_slice %85 {offsets = [1, 0], sizes = [16, 44], strides = [1, 1]} : vector<22x44xf32> to vector<16x44xf32>
    %93 = vector.broadcast %91 : vector<1x44xf32> to vector<16x44xf32>
    %94 = arith.mulf %93, %92 : vector<16x44xf32>
    %95 = arith.addf %90, %94 : vector<16x44xf32>
    %c16 = arith.constant 16 : index
    %c0_30 = arith.constant 0 : index
    %96 = vector.load %arg2[%c16, %c0_30] : memref<49x44xf32, #tpu.memory_space<vmem>>, vector<1x44xf32>
    %97 = vector.extract_strided_slice %85 {offsets = [2, 0], sizes = [16, 44], strides = [1, 1]} : vector<22x44xf32> to vector<16x44xf32>
    %98 = vector.broadcast %96 : vector<1x44xf32> to vector<16x44xf32>
    %99 = arith.mulf %98, %97 : vector<16x44xf32>
    %100 = arith.addf %95, %99 : vector<16x44xf32>
    %c23 = arith.constant 23 : index
    %c0_31 = arith.constant 0 : index
    %101 = vector.load %arg2[%c23, %c0_31] : memref<49x44xf32, #tpu.memory_space<vmem>>, vector<1x44xf32>
    %102 = vector.extract_strided_slice %85 {offsets = [3, 0], sizes = [16, 44], strides = [1, 1]} : vector<22x44xf32> to vector<16x44xf32>
    %103 = vector.broadcast %101 : vector<1x44xf32> to vector<16x44xf32>
    %104 = arith.mulf %103, %102 : vector<16x44xf32>
    %105 = arith.addf %100, %104 : vector<16x44xf32>
    %c30 = arith.constant 30 : index
    %c0_32 = arith.constant 0 : index
    %106 = vector.load %arg2[%c30, %c0_32] : memref<49x44xf32, #tpu.memory_space<vmem>>, vector<1x44xf32>
    %107 = vector.extract_strided_slice %85 {offsets = [4, 0], sizes = [16, 44], strides = [1, 1]} : vector<22x44xf32> to vector<16x44xf32>
    %108 = vector.broadcast %106 : vector<1x44xf32> to vector<16x44xf32>
    %109 = arith.mulf %108, %107 : vector<16x44xf32>
    %110 = arith.addf %105, %109 : vector<16x44xf32>
    %c37 = arith.constant 37 : index
    %c0_33 = arith.constant 0 : index
    %111 = vector.load %arg2[%c37, %c0_33] : memref<49x44xf32, #tpu.memory_space<vmem>>, vector<1x44xf32>
    %112 = vector.extract_strided_slice %85 {offsets = [5, 0], sizes = [16, 44], strides = [1, 1]} : vector<22x44xf32> to vector<16x44xf32>
    %113 = vector.broadcast %111 : vector<1x44xf32> to vector<16x44xf32>
    %114 = arith.mulf %113, %112 : vector<16x44xf32>
    %115 = arith.addf %110, %114 : vector<16x44xf32>
    %c44 = arith.constant 44 : index
    %c0_34 = arith.constant 0 : index
    %116 = vector.load %arg2[%c44, %c0_34] : memref<49x44xf32, #tpu.memory_space<vmem>>, vector<1x44xf32>
    %117 = vector.extract_strided_slice %85 {offsets = [6, 0], sizes = [16, 44], strides = [1, 1]} : vector<22x44xf32> to vector<16x44xf32>
    %118 = vector.broadcast %116 : vector<1x44xf32> to vector<16x44xf32>
    %119 = arith.mulf %118, %117 : vector<16x44xf32>
    %120 = arith.addf %115, %119 : vector<16x44xf32>
    %121 = vector.extract_strided_slice %11 {offsets = [0, 3], sizes = [22, 44], strides = [1, 1]} : vector<22x50xf32> to vector<22x44xf32>
    %c3_35 = arith.constant 3 : index
    %c0_36 = arith.constant 0 : index
    %122 = vector.load %arg2[%c3_35, %c0_36] : memref<49x44xf32, #tpu.memory_space<vmem>>, vector<1x44xf32>
    %123 = vector.extract_strided_slice %121 {offsets = [0, 0], sizes = [16, 44], strides = [1, 1]} : vector<22x44xf32> to vector<16x44xf32>
    %124 = vector.broadcast %122 : vector<1x44xf32> to vector<16x44xf32>
    %125 = arith.mulf %124, %123 : vector<16x44xf32>
    %126 = arith.addf %120, %125 : vector<16x44xf32>
    %c10 = arith.constant 10 : index
    %c0_37 = arith.constant 0 : index
    %127 = vector.load %arg2[%c10, %c0_37] : memref<49x44xf32, #tpu.memory_space<vmem>>, vector<1x44xf32>
    %128 = vector.extract_strided_slice %121 {offsets = [1, 0], sizes = [16, 44], strides = [1, 1]} : vector<22x44xf32> to vector<16x44xf32>
    %129 = vector.broadcast %127 : vector<1x44xf32> to vector<16x44xf32>
    %130 = arith.mulf %129, %128 : vector<16x44xf32>
    %131 = arith.addf %126, %130 : vector<16x44xf32>
    %c17 = arith.constant 17 : index
    %c0_38 = arith.constant 0 : index
    %132 = vector.load %arg2[%c17, %c0_38] : memref<49x44xf32, #tpu.memory_space<vmem>>, vector<1x44xf32>
    %133 = vector.extract_strided_slice %121 {offsets = [2, 0], sizes = [16, 44], strides = [1, 1]} : vector<22x44xf32> to vector<16x44xf32>
    %134 = vector.broadcast %132 : vector<1x44xf32> to vector<16x44xf32>
    %135 = arith.mulf %134, %133 : vector<16x44xf32>
    %136 = arith.addf %131, %135 : vector<16x44xf32>
    %c24 = arith.constant 24 : index
    %c0_39 = arith.constant 0 : index
    %137 = vector.load %arg2[%c24, %c0_39] : memref<49x44xf32, #tpu.memory_space<vmem>>, vector<1x44xf32>
    %138 = vector.extract_strided_slice %121 {offsets = [3, 0], sizes = [16, 44], strides = [1, 1]} : vector<22x44xf32> to vector<16x44xf32>
    %139 = vector.broadcast %137 : vector<1x44xf32> to vector<16x44xf32>
    %140 = arith.mulf %139, %138 : vector<16x44xf32>
    %141 = arith.addf %136, %140 : vector<16x44xf32>
    %c31 = arith.constant 31 : index
    %c0_40 = arith.constant 0 : index
    %142 = vector.load %arg2[%c31, %c0_40] : memref<49x44xf32, #tpu.memory_space<vmem>>, vector<1x44xf32>
    %143 = vector.extract_strided_slice %121 {offsets = [4, 0], sizes = [16, 44], strides = [1, 1]} : vector<22x44xf32> to vector<16x44xf32>
    %144 = vector.broadcast %142 : vector<1x44xf32> to vector<16x44xf32>
    %145 = arith.mulf %144, %143 : vector<16x44xf32>
    %146 = arith.addf %141, %145 : vector<16x44xf32>
    %c38 = arith.constant 38 : index
    %c0_41 = arith.constant 0 : index
    %147 = vector.load %arg2[%c38, %c0_41] : memref<49x44xf32, #tpu.memory_space<vmem>>, vector<1x44xf32>
    %148 = vector.extract_strided_slice %121 {offsets = [5, 0], sizes = [16, 44], strides = [1, 1]} : vector<22x44xf32> to vector<16x44xf32>
    %149 = vector.broadcast %147 : vector<1x44xf32> to vector<16x44xf32>
    %150 = arith.mulf %149, %148 : vector<16x44xf32>
    %151 = arith.addf %146, %150 : vector<16x44xf32>
    %c45 = arith.constant 45 : index
    %c0_42 = arith.constant 0 : index
    %152 = vector.load %arg2[%c45, %c0_42] : memref<49x44xf32, #tpu.memory_space<vmem>>, vector<1x44xf32>
    %153 = vector.extract_strided_slice %121 {offsets = [6, 0], sizes = [16, 44], strides = [1, 1]} : vector<22x44xf32> to vector<16x44xf32>
    %154 = vector.broadcast %152 : vector<1x44xf32> to vector<16x44xf32>
    %155 = arith.mulf %154, %153 : vector<16x44xf32>
    %156 = arith.addf %151, %155 : vector<16x44xf32>
    %157 = vector.extract_strided_slice %11 {offsets = [0, 4], sizes = [22, 44], strides = [1, 1]} : vector<22x50xf32> to vector<22x44xf32>
    %c4 = arith.constant 4 : index
    %c0_43 = arith.constant 0 : index
    %158 = vector.load %arg2[%c4, %c0_43] : memref<49x44xf32, #tpu.memory_space<vmem>>, vector<1x44xf32>
    %159 = vector.extract_strided_slice %157 {offsets = [0, 0], sizes = [16, 44], strides = [1, 1]} : vector<22x44xf32> to vector<16x44xf32>
    %160 = vector.broadcast %158 : vector<1x44xf32> to vector<16x44xf32>
    %161 = arith.mulf %160, %159 : vector<16x44xf32>
    %162 = arith.addf %156, %161 : vector<16x44xf32>
    %c11 = arith.constant 11 : index
    %c0_44 = arith.constant 0 : index
    %163 = vector.load %arg2[%c11, %c0_44] : memref<49x44xf32, #tpu.memory_space<vmem>>, vector<1x44xf32>
    %164 = vector.extract_strided_slice %157 {offsets = [1, 0], sizes = [16, 44], strides = [1, 1]} : vector<22x44xf32> to vector<16x44xf32>
    %165 = vector.broadcast %163 : vector<1x44xf32> to vector<16x44xf32>
    %166 = arith.mulf %165, %164 : vector<16x44xf32>
    %167 = arith.addf %162, %166 : vector<16x44xf32>
    %c18 = arith.constant 18 : index
    %c0_45 = arith.constant 0 : index
    %168 = vector.load %arg2[%c18, %c0_45] : memref<49x44xf32, #tpu.memory_space<vmem>>, vector<1x44xf32>
    %169 = vector.extract_strided_slice %157 {offsets = [2, 0], sizes = [16, 44], strides = [1, 1]} : vector<22x44xf32> to vector<16x44xf32>
    %170 = vector.broadcast %168 : vector<1x44xf32> to vector<16x44xf32>
    %171 = arith.mulf %170, %169 : vector<16x44xf32>
    %172 = arith.addf %167, %171 : vector<16x44xf32>
    %c25_46 = arith.constant 25 : index
    %c0_47 = arith.constant 0 : index
    %173 = vector.load %arg2[%c25_46, %c0_47] : memref<49x44xf32, #tpu.memory_space<vmem>>, vector<1x44xf32>
    %174 = vector.extract_strided_slice %157 {offsets = [3, 0], sizes = [16, 44], strides = [1, 1]} : vector<22x44xf32> to vector<16x44xf32>
    %175 = vector.broadcast %173 : vector<1x44xf32> to vector<16x44xf32>
    %176 = arith.mulf %175, %174 : vector<16x44xf32>
    %177 = arith.addf %172, %176 : vector<16x44xf32>
    %c32 = arith.constant 32 : index
    %c0_48 = arith.constant 0 : index
    %178 = vector.load %arg2[%c32, %c0_48] : memref<49x44xf32, #tpu.memory_space<vmem>>, vector<1x44xf32>
    %179 = vector.extract_strided_slice %157 {offsets = [4, 0], sizes = [16, 44], strides = [1, 1]} : vector<22x44xf32> to vector<16x44xf32>
    %180 = vector.broadcast %178 : vector<1x44xf32> to vector<16x44xf32>
    %181 = arith.mulf %180, %179 : vector<16x44xf32>
    %182 = arith.addf %177, %181 : vector<16x44xf32>
    %c39 = arith.constant 39 : index
    %c0_49 = arith.constant 0 : index
    %183 = vector.load %arg2[%c39, %c0_49] : memref<49x44xf32, #tpu.memory_space<vmem>>, vector<1x44xf32>
    %184 = vector.extract_strided_slice %157 {offsets = [5, 0], sizes = [16, 44], strides = [1, 1]} : vector<22x44xf32> to vector<16x44xf32>
    %185 = vector.broadcast %183 : vector<1x44xf32> to vector<16x44xf32>
    %186 = arith.mulf %185, %184 : vector<16x44xf32>
    %187 = arith.addf %182, %186 : vector<16x44xf32>
    %c46 = arith.constant 46 : index
    %c0_50 = arith.constant 0 : index
    %188 = vector.load %arg2[%c46, %c0_50] : memref<49x44xf32, #tpu.memory_space<vmem>>, vector<1x44xf32>
    %189 = vector.extract_strided_slice %157 {offsets = [6, 0], sizes = [16, 44], strides = [1, 1]} : vector<22x44xf32> to vector<16x44xf32>
    %190 = vector.broadcast %188 : vector<1x44xf32> to vector<16x44xf32>
    %191 = arith.mulf %190, %189 : vector<16x44xf32>
    %192 = arith.addf %187, %191 : vector<16x44xf32>
    %193 = vector.extract_strided_slice %11 {offsets = [0, 5], sizes = [22, 44], strides = [1, 1]} : vector<22x50xf32> to vector<22x44xf32>
    %c5 = arith.constant 5 : index
    %c0_51 = arith.constant 0 : index
    %194 = vector.load %arg2[%c5, %c0_51] : memref<49x44xf32, #tpu.memory_space<vmem>>, vector<1x44xf32>
    %195 = vector.extract_strided_slice %193 {offsets = [0, 0], sizes = [16, 44], strides = [1, 1]} : vector<22x44xf32> to vector<16x44xf32>
    %196 = vector.broadcast %194 : vector<1x44xf32> to vector<16x44xf32>
    %197 = arith.mulf %196, %195 : vector<16x44xf32>
    %198 = arith.addf %192, %197 : vector<16x44xf32>
    %c12 = arith.constant 12 : index
    %c0_52 = arith.constant 0 : index
    %199 = vector.load %arg2[%c12, %c0_52] : memref<49x44xf32, #tpu.memory_space<vmem>>, vector<1x44xf32>
    %200 = vector.extract_strided_slice %193 {offsets = [1, 0], sizes = [16, 44], strides = [1, 1]} : vector<22x44xf32> to vector<16x44xf32>
    %201 = vector.broadcast %199 : vector<1x44xf32> to vector<16x44xf32>
    %202 = arith.mulf %201, %200 : vector<16x44xf32>
    %203 = arith.addf %198, %202 : vector<16x44xf32>
    %c19 = arith.constant 19 : index
    %c0_53 = arith.constant 0 : index
    %204 = vector.load %arg2[%c19, %c0_53] : memref<49x44xf32, #tpu.memory_space<vmem>>, vector<1x44xf32>
    %205 = vector.extract_strided_slice %193 {offsets = [2, 0], sizes = [16, 44], strides = [1, 1]} : vector<22x44xf32> to vector<16x44xf32>
    %206 = vector.broadcast %204 : vector<1x44xf32> to vector<16x44xf32>
    %207 = arith.mulf %206, %205 : vector<16x44xf32>
    %208 = arith.addf %203, %207 : vector<16x44xf32>
    %c26 = arith.constant 26 : index
    %c0_54 = arith.constant 0 : index
    %209 = vector.load %arg2[%c26, %c0_54] : memref<49x44xf32, #tpu.memory_space<vmem>>, vector<1x44xf32>
    %210 = vector.extract_strided_slice %193 {offsets = [3, 0], sizes = [16, 44], strides = [1, 1]} : vector<22x44xf32> to vector<16x44xf32>
    %211 = vector.broadcast %209 : vector<1x44xf32> to vector<16x44xf32>
    %212 = arith.mulf %211, %210 : vector<16x44xf32>
    %213 = arith.addf %208, %212 : vector<16x44xf32>
    %c33 = arith.constant 33 : index
    %c0_55 = arith.constant 0 : index
    %214 = vector.load %arg2[%c33, %c0_55] : memref<49x44xf32, #tpu.memory_space<vmem>>, vector<1x44xf32>
    %215 = vector.extract_strided_slice %193 {offsets = [4, 0], sizes = [16, 44], strides = [1, 1]} : vector<22x44xf32> to vector<16x44xf32>
    %216 = vector.broadcast %214 : vector<1x44xf32> to vector<16x44xf32>
    %217 = arith.mulf %216, %215 : vector<16x44xf32>
    %218 = arith.addf %213, %217 : vector<16x44xf32>
    %c40 = arith.constant 40 : index
    %c0_56 = arith.constant 0 : index
    %219 = vector.load %arg2[%c40, %c0_56] : memref<49x44xf32, #tpu.memory_space<vmem>>, vector<1x44xf32>
    %220 = vector.extract_strided_slice %193 {offsets = [5, 0], sizes = [16, 44], strides = [1, 1]} : vector<22x44xf32> to vector<16x44xf32>
    %221 = vector.broadcast %219 : vector<1x44xf32> to vector<16x44xf32>
    %222 = arith.mulf %221, %220 : vector<16x44xf32>
    %223 = arith.addf %218, %222 : vector<16x44xf32>
    %c47 = arith.constant 47 : index
    %c0_57 = arith.constant 0 : index
    %224 = vector.load %arg2[%c47, %c0_57] : memref<49x44xf32, #tpu.memory_space<vmem>>, vector<1x44xf32>
    %225 = vector.extract_strided_slice %193 {offsets = [6, 0], sizes = [16, 44], strides = [1, 1]} : vector<22x44xf32> to vector<16x44xf32>
    %226 = vector.broadcast %224 : vector<1x44xf32> to vector<16x44xf32>
    %227 = arith.mulf %226, %225 : vector<16x44xf32>
    %228 = arith.addf %223, %227 : vector<16x44xf32>
    %229 = vector.extract_strided_slice %11 {offsets = [0, 6], sizes = [22, 44], strides = [1, 1]} : vector<22x50xf32> to vector<22x44xf32>
    %c6 = arith.constant 6 : index
    %c0_58 = arith.constant 0 : index
    %230 = vector.load %arg2[%c6, %c0_58] : memref<49x44xf32, #tpu.memory_space<vmem>>, vector<1x44xf32>
    %231 = vector.extract_strided_slice %229 {offsets = [0, 0], sizes = [16, 44], strides = [1, 1]} : vector<22x44xf32> to vector<16x44xf32>
    %232 = vector.broadcast %230 : vector<1x44xf32> to vector<16x44xf32>
    %233 = arith.mulf %232, %231 : vector<16x44xf32>
    %234 = arith.addf %228, %233 : vector<16x44xf32>
    %c13 = arith.constant 13 : index
    %c0_59 = arith.constant 0 : index
    %235 = vector.load %arg2[%c13, %c0_59] : memref<49x44xf32, #tpu.memory_space<vmem>>, vector<1x44xf32>
    %236 = vector.extract_strided_slice %229 {offsets = [1, 0], sizes = [16, 44], strides = [1, 1]} : vector<22x44xf32> to vector<16x44xf32>
    %237 = vector.broadcast %235 : vector<1x44xf32> to vector<16x44xf32>
    %238 = arith.mulf %237, %236 : vector<16x44xf32>
    %239 = arith.addf %234, %238 : vector<16x44xf32>
    %c20 = arith.constant 20 : index
    %c0_60 = arith.constant 0 : index
    %240 = vector.load %arg2[%c20, %c0_60] : memref<49x44xf32, #tpu.memory_space<vmem>>, vector<1x44xf32>
    %241 = vector.extract_strided_slice %229 {offsets = [2, 0], sizes = [16, 44], strides = [1, 1]} : vector<22x44xf32> to vector<16x44xf32>
    %242 = vector.broadcast %240 : vector<1x44xf32> to vector<16x44xf32>
    %243 = arith.mulf %242, %241 : vector<16x44xf32>
    %244 = arith.addf %239, %243 : vector<16x44xf32>
    %c27 = arith.constant 27 : index
    %c0_61 = arith.constant 0 : index
    %245 = vector.load %arg2[%c27, %c0_61] : memref<49x44xf32, #tpu.memory_space<vmem>>, vector<1x44xf32>
    %246 = vector.extract_strided_slice %229 {offsets = [3, 0], sizes = [16, 44], strides = [1, 1]} : vector<22x44xf32> to vector<16x44xf32>
    %247 = vector.broadcast %245 : vector<1x44xf32> to vector<16x44xf32>
    %248 = arith.mulf %247, %246 : vector<16x44xf32>
    %249 = arith.addf %244, %248 : vector<16x44xf32>
    %c34 = arith.constant 34 : index
    %c0_62 = arith.constant 0 : index
    %250 = vector.load %arg2[%c34, %c0_62] : memref<49x44xf32, #tpu.memory_space<vmem>>, vector<1x44xf32>
    %251 = vector.extract_strided_slice %229 {offsets = [4, 0], sizes = [16, 44], strides = [1, 1]} : vector<22x44xf32> to vector<16x44xf32>
    %252 = vector.broadcast %250 : vector<1x44xf32> to vector<16x44xf32>
    %253 = arith.mulf %252, %251 : vector<16x44xf32>
    %254 = arith.addf %249, %253 : vector<16x44xf32>
    %c41 = arith.constant 41 : index
    %c0_63 = arith.constant 0 : index
    %255 = vector.load %arg2[%c41, %c0_63] : memref<49x44xf32, #tpu.memory_space<vmem>>, vector<1x44xf32>
    %256 = vector.extract_strided_slice %229 {offsets = [5, 0], sizes = [16, 44], strides = [1, 1]} : vector<22x44xf32> to vector<16x44xf32>
    %257 = vector.broadcast %255 : vector<1x44xf32> to vector<16x44xf32>
    %258 = arith.mulf %257, %256 : vector<16x44xf32>
    %259 = arith.addf %254, %258 : vector<16x44xf32>
    %c48 = arith.constant 48 : index
    %c0_64 = arith.constant 0 : index
    %260 = vector.load %arg2[%c48, %c0_64] : memref<49x44xf32, #tpu.memory_space<vmem>>, vector<1x44xf32>
    %261 = vector.extract_strided_slice %229 {offsets = [6, 0], sizes = [16, 44], strides = [1, 1]} : vector<22x44xf32> to vector<16x44xf32>
    %262 = vector.broadcast %260 : vector<1x44xf32> to vector<16x44xf32>
    %263 = arith.mulf %262, %261 : vector<16x44xf32>
    %264 = arith.addf %259, %263 : vector<16x44xf32>
    %265 = vector.extract_strided_slice %264 {offsets = [0, 0], sizes = [16, 16], strides = [1, 1]} : vector<16x44xf32> to vector<16x16xf32>
    %266 = vector.extract_strided_slice %264 {offsets = [0, 22], sizes = [16, 16], strides = [1, 1]} : vector<16x44xf32> to vector<16x16xf32>
    %267 = arith.addf %265, %266 : vector<16x16xf32>
    %268 = arith.negf %267 : vector<16x16xf32>
    %269 = math.exp %268 : vector<16x16xf32>
    %cst_65 = arith.constant 1.000000e+00 : f32
    %270 = vector.broadcast %cst_65 : f32 to vector<16x16xf32>
    %271 = arith.addf %270, %269 : vector<16x16xf32>
    %272 = arith.divf %270, %271 : vector<16x16xf32>
    %c0_66 = arith.constant 0 : index
    %c0_67 = arith.constant 0 : index
    %c0_68 = arith.constant 0 : index
    %c0_69 = arith.constant 0 : index
    %273 = vector.load %arg3[%c0_66, %c0_67, %c0_68, %c0_69] : memref<1x1x16x16xf32, #tpu.memory_space<vmem>>, vector<1x1x16x16xf32>
    %274 = vector.shape_cast %273 : vector<1x1x16x16xf32> to vector<16x16xf32>
    %275 = vector.shape_cast %272 : vector<16x16xf32> to vector<1x1x16x16xf32>
    tpu.vector_store %arg3[%c0_66, %c0_67, %c0_68, %c0_69], %275 {strides = array<i32>} : memref<1x1x16x16xf32, #tpu.memory_space<vmem>>, vector<1x1x16x16xf32>,
    return
  }
  func.func @transform_0(%arg0: i32) -> (i32, i32, i32, i32) {
    %c0_i32 = arith.constant 0 : i32
    %c0_i32_0 = arith.constant 0 : i32
    %c0_i32_1 = arith.constant 0 : i32
    %c0_i32_2 = arith.constant 0 : i32
    return %arg0, %c0_i32, %c0_i32_0, %c0_i32_1 : i32, i32, i32, i32
  }
  func.func @transform_1(%arg0: i32) -> (i32, i32) {
    %c0_i32 = arith.constant 0 : i32
    %c0_i32_0 = arith.constant 0 : i32
    %c0_i32_1 = arith.constant 0 : i32
    return %c0_i32, %c0_i32_0 : i32, i32
  }
  func.func @transform_2(%arg0: i32) -> (i32, i32, i32, i32) {
    %c0_i32 = arith.constant 0 : i32
    %c0_i32_0 = arith.constant 0 : i32
    %c0_i32_1 = arith.constant 0 : i32
    %c0_i32_2 = arith.constant 0 : i32
    return %arg0, %c0_i32, %c0_i32_0, %c0_i32_1 : i32, i32, i32, i32
  }
}

</mosaic_0001>

<llo_original>
// kernel: tpu_custom_call.1
$region0: #{tpu_custom_call.1}
  #allocation0 [shape = 'u32[]', space=smem, size = 0x4, offset = 0x4, fixed_abs, tag = 'smem constant byte address 0x4 - core index']
  #allocation1 [shape = 'u32[144,128]{1,0:T(1,128)}', space=vmem, size = 0x12000, scoped, tag = 'internal scratch']
  #allocation2 [shape = 'f32[22,50]{1,0:T(8,128)}', space=vmem, size = 0x3000, scoped, tag = 'scratch operand']
  %s0 = inlined_call_operand.hbm [shape: f32[2,4,16,16], index: 0, kind: input, shape index: {}]
  %s1 = inlined_call_operand.vmem [shape: f32[49,44], index: 1, kind: input, shape index: {}]
  %s2 = inlined_call_operand.hbm [shape: f32[2,1,16,16], index: 2, kind: output, shape index: {}]
  %s3 = sld [smem:[#allocation0]]
  $region45: #{tpu_custom_call.1} parent=0
    _
  %s5 = ssub.s32 1, %s3
  %s6 = scalar_select 0, %s5, %s3
  $region1: #{tpu_custom_call.1} parent=0
    #allocation3 [shape = 'u8[65536]{0}', space=vmem, size = 0x10000, scoped, tag = 'input window, operand 0']
    #allocation4 [shape = 's32[2]{0}', space=sflag, size = 0x8, scoped, tag = 'scoped memory for tpu_custom_call.1']
    #allocation5 [shape = 's32[2]{0}', space=sflag, size = 0x8, scoped, tag = 'scoped memory for tpu_custom_call.1']
    #allocation6 [shape = 'u8[16384]{0}', space=vmem, size = 0x4000, scoped, tag = 'output window, operand 0']
    %7 = vsyncpa [#allocation4], 0
    %s8 = scalar_lea.sflag [#allocation4], 1
    %9 = vsyncpa %s8, 0
    %10 = vsyncpa [#allocation5], 0
    %s11 = scalar_lea.sflag [#allocation5], 1
    %12 = vsyncpa %s11, 0
    loop: start=0, step=1, limit=4
    $region2: #{tpu_custom_call.1} parent=1 // loop_pre_header
      _
    $region3: #{tpu_custom_call.1} parent=1 // loop_header
      %s14 = sphi 0, %s18
      %p15 = scmp.ge.s32.totalorder %s14, 4
      %s24 = sphi 0, %s26
      %s27 = sphi 0, %s24
      %s28 = sphi 0, %s27
      %s44 = sphi 0, %s28
      %s48 = sphi 0, %s48
      %s50 = sphi 0, %s48
      %s51 = sphi 0, %s50
      %s65 = sphi 0, %s51
      %s71 = sphi 0, %s73
      %s74 = sphi 0, %s71
      %s75 = sphi 0, %s74
      %s91 = sphi 0, %s75
    $region4: #{tpu_custom_call.1} parent=1 // loop_header_branch
      %17 = sbr.rel (%p15) target = $region8
    $region5: #{tpu_custom_call.1} parent=1 // loop_body
      %s19 = ssub.s32 %s14, 1
      %s20 = ssub.s32 %s14, 2
      %s21 = sadd.s32 %s14, 1
      %s22 = ssub.s32 %s14, %s21
      %p23 = scmp.eq.s32.totalorder %s22, 0
      %s25 = sadd.s32 %s24, 1
      %s26 = scalar_select %p23, %s24, %s25
      %p29 = pneg %p23
      %p30 = scmp.eq.s32.totalorder %s14, 1
      %p31 = por %p29, %p30
      %p32 = scmp.ne.s32.totalorder %s24, %s27
      %p33 = scmp.eq.s32.totalorder %s14, 0
      %p34 = por %p32, %p33
      %p35 = scmp.ne.s32.totalorder %s24, %s27
      %p36 = scmp.eq.s32.totalorder %s19, 1
      %p37 = por %p35, %p36
      %p38 = scmp.ne.s32.totalorder %s27, %s28
      %p39 = scmp.eq.s32.totalorder %s19, 0
      %p40 = por %p38, %p39
      %p41 = scmp.ne.s32.totalorder %s27, %s28
      %p42 = scmp.eq.s32.totalorder %s20, 1
      %p43 = por %p41, %p42
      %p45 = scmp.ne.s32.totalorder %s28, %s44
      %p46 = scmp.eq.s32.totalorder %s20, 0
      %p47 = por %p45, %p46
      %s49 = sadd.s32 %s48, 1
      %p52 = scmp.eq.s32.totalorder %s14, 1
      %p53 = scmp.ne.s32.totalorder %s48, %s50
      %p54 = scmp.eq.s32.totalorder %s14, 0
      %p55 = por %p53, %p54
      %p56 = scmp.ne.s32.totalorder %s48, %s50
      %p57 = scmp.eq.s32.totalorder %s19, 1
      %p58 = por %p56, %p57
      %p59 = scmp.ne.s32.totalorder %s50, %s51
      %p60 = scmp.eq.s32.totalorder %s19, 0
      %p61 = por %p59, %p60
      %p62 = scmp.ne.s32.totalorder %s50, %s51
      %p63 = scmp.eq.s32.totalorder %s20, 1
      %p64 = por %p62, %p63
      %p66 = scmp.ne.s32.totalorder %s51, %s65
      %p67 = scmp.eq.s32.totalorder %s20, 0
      %p68 = por %p66, %p67
      %s69 = ssub.s32 %s14, %s21
      %p70 = scmp.eq.s32.totalorder %s69, 0
      %s72 = sadd.s32 %s71, 1
      %s73 = scalar_select %p70, %s71, %s72
      %p76 = pneg %p70
      %p77 = scmp.eq.s32.totalorder %s14, 1
      %p78 = por %p76, %p77
      %p79 = scmp.ne.s32.totalorder %s71, %s74
      %p80 = scmp.eq.s32.totalorder %s14, 0
      %p81 = por %p79, %p80
      %p82 = scmp.ne.s32.totalorder %s71, %s74
      %p83 = scmp.eq.s32.totalorder %s19, 1
      %p84 = por %p82, %p83
      %p85 = scmp.ne.s32.totalorder %s74, %s75
      %p86 = scmp.eq.s32.totalorder %s19, 0
      %p87 = por %p85, %p86
      %p88 = scmp.ne.s32.totalorder %s74, %s75
      %p89 = scmp.eq.s32.totalorder %s20, 1
      %p90 = por %p88, %p89
      %p92 = scmp.ne.s32.totalorder %s75, %s91
      %p93 = scmp.eq.s32.totalorder %s20, 0
      %p94 = por %p92, %p93
      %p95 = scmp.le.s32.totalorder 1, %s14
      %p96 = scmp.lt.s32.totalorder %s14, 3
      %p97 = pnand %p95, %p96
      %p98 = pneg %p97
      // Predicated region
      $region9: #{tpu_custom_call.1} parent=5 // pred_check
        _
      $region10: #{tpu_custom_call.1} parent=5 // pred_check_branch
        %100 = sbr.rel (%p97) target = $region12
      $region11: #{tpu_custom_call.1} parent=5 // pred_region
        %s101 = ssub.s32 %s14, 1
        // Predicated region
        $region13: #{tpu_custom_call.1} parent=11 // pred_check
          %p102 = pneg %p61
        $region14: #{tpu_custom_call.1} parent=11 // pred_check_branch
          %104 = sbr.rel (%p102) target = $region16
        $region15: #{tpu_custom_call.1} parent=11 // pred_region
          _
        $region16: #{tpu_custom_call.1} parent=11 // pred_fallthru
          _
      $region12: #{tpu_custom_call.1} parent=5 // pred_fallthru
        _
      %p105 = scmp.lt.s32.totalorder %s14, 2
      // Predicated region
      $region17: #{tpu_custom_call.1} parent=5 // pred_check
        %p106 = pneg %p105
      $region18: #{tpu_custom_call.1} parent=5 // pred_check_branch
        %108 = sbr.rel (%p106) target = $region20
      $region19: #{tpu_custom_call.1} parent=5 // pred_region
        // Predicated region
        $region21: #{tpu_custom_call.1} parent=19 // pred_check
          %p109 = pneg %p34
        $region22: #{tpu_custom_call.1} parent=19 // pred_check_branch
          %111 = sbr.rel (%p109) target = $region24
        $region23: #{tpu_custom_call.1} parent=19 // pred_region
          %s112 = sand.u32 %s24, 1
          %s113 = scalar_lea.sflag [#allocation4], %s112
          %s114 = sand.u32 %s24, 1
          %s115 = smul.addr %s114, 64
          %s116 = scalar_lea.vmem [#allocation3], %s115
          %s118 = ssub.s32 1024, 1024
          %119 = vsyncadd %s113, %s118
          %s120 = smul.addr %s14, 8
          %s121 = smul.addr %s120, 128
          %s122 = scalar_lea.hbm %s0, %s121
          %s123 = sshll.u32 %s116, 4
          %s124 = int_to_ptr.vmem [resolvable:$true] %s123
          %129 = dma.hbm_to_vmem [thread:$0]  %s122, 1024, %s124, %s113, 128, 128, 8
        $region24: #{tpu_custom_call.1} parent=19 // pred_fallthru
          _
      $region20: #{tpu_custom_call.1} parent=5 // pred_fallthru
        _
      %p130 = scmp.le.s32.totalorder 1, %s14
      %p131 = scmp.lt.s32.totalorder %s14, 3
      %p132 = pnand %p130, %p131
      %p133 = pneg %p132
      // Predicated region
      $region25: #{tpu_custom_call.1} parent=5 // pred_check
        _
      $region26: #{tpu_custom_call.1} parent=5 // pred_check_branch
        %135 = sbr.rel (%p132) target = $region28
      $region27: #{tpu_custom_call.1} parent=5 // pred_region
        %s136 = ssub.s32 %s14, 1
        %s137 = sand.u32 %s27, 1
        %s138 = scalar_lea.sflag [#allocation4], %s137
        %s139 = sand.u32 %s27, 1
        %s140 = smul.addr %s139, 64
        %s141 = scalar_lea.vmem [#allocation3], %s140
        // Predicated region
        $region29: #{tpu_custom_call.1} parent=27 // pred_check
          %p142 = pneg %p40
        $region30: #{tpu_custom_call.1} parent=27 // pred_check_branch
          %144 = sbr.rel (%p142) target = $region32
        $region31: #{tpu_custom_call.1} parent=27 // pred_region
          %145 = dma.done %s138, 1024
        $region32: #{tpu_custom_call.1} parent=27 // pred_fallthru
          _
        %s146 = sand.u32 %s27, 1
        %s147 = scalar_lea.sflag [#allocation4], %s146
        %s148 = sand.u32 %s27, 1
        %s149 = smul.addr %s148, 64
        %s150 = scalar_lea.vmem [#allocation3], %s149
        %p151 = pneg %p40
        %p152 = pneg %p37
        %p153 = pneg %p61
        %p154 = pneg %p58
        %p155 = pneg %p87
        %p156 = pneg %p84
        %s157 = sand.u32 %s74, 1
        %s158 = scalar_lea.sflag [#allocation5], %s157
        %s159 = sand.u32 %s74, 1
        %s160 = smul.addr %s159, 16
        %s161 = scalar_lea.vmem [#allocation6], %s160
        %v162 = vld [vmem:[%s141] sm:$0xff]
        %v163 = vld [vmem:[%s141 + $0x8] sm:$0xff]
        %v164 = vld [vmem:[%s141 + $0x10] sm:$0xff]
        %v165 = vld [vmem:[%s141 + $0x18] sm:$0xff]
        %v166 = vld [vmem:[%s141 + $0x20] sm:$0xff]
        %v167 = vld [vmem:[%s141 + $0x28] sm:$0xff]
        %v168 = vld [vmem:[%s141 + $0x30] sm:$0xff]
        %v169 = vld [vmem:[%s141 + $0x38] sm:$0xff]
        %vm170 = vcmask 130048
        %v171 = vsel %vm170, %v162, 0.0
        %v172 = vsel %vm170, %v164, 0.0
        %v173 = vadd.f32 %v171, %v172
        %v174 = vsel %vm170, %v166, 0.0
        %v175 = vadd.f32 %v173, %v174
        %v176 = vsel %vm170, %v168, 0.0
        %v177 = vadd.f32 %v175, %v176
        %v178 = vsel %vm170, %v163, 0.0
        %v179 = vsel %vm170, %v165, 0.0
        %v180 = vadd.f32 %v178, %v179
        %v181 = vsel %vm170, %v167, 0.0
        %v182 = vadd.f32 %v180, %v181
        %v183 = vsel %vm170, %v169, 0.0
        %v184 = vadd.f32 %v182, %v183
        %v185 = vmul.f32 %v177, 0.25
        %v186 = vmul.f32 %v184, 0.25
        %v187 = vsel %vm170, %v162, -inf
        %v188 = vsel %vm170, %v164, -inf
        %v189 = vsel %vm170, %v166, -inf
        %v190 = vmax.f32 %v187, %v189
        %v191 = vsel %vm170, %v168, -inf
        %v192 = vmax.f32 %v188, %v191
        %v193 = vmax.f32 %v190, %v192
        %v194 = vsel %vm170, %v163, -inf
        %v195 = vsel %vm170, %v165, -inf
        %v196 = vsel %vm170, %v167, -inf
        %v197 = vmax.f32 %v194, %v196
        %v198 = vsel %vm170, %v169, -inf
        %v199 = vmax.f32 %v195, %v198
        %v200 = vmax.f32 %v197, %v199
        %vm201 = vcmask 408576
        %202 = vst.msk [vmem:[#allocation2] sm:$0xff] %vm201, 0.0
        %203 = vst.msk [vmem:[#allocation2 + $0x8] sm:$0xff] %vm201, 0.0
        %vm204 = vcmask 406528
        %205 = vst.msk [vmem:[#allocation2 + $0x10] sm:$0x3f] %vm204, 0.0
        %208 = vrot.lane.b32.xlu0 %v185, 3
        %v209 = vpop.permute.xlu0 %208
        %210 = vrot.lane.b32.xlu0 %v186, 3
        %v211 = vpop.permute.xlu0 %210
        %vm214 = vcmask 154648
        %215 = vst.msk [vmem:[#allocation2 + $0x3] sm:$0xff] %vm214, %v209
        %216 = vst.msk [vmem:[#allocation2 + $0xb] sm:$0xff] %vm214, %v211
        %219 = vrot.lane.b32.xlu0 %v193, 25
        %v220 = vpop.permute.xlu0 %219
        %221 = vrot.lane.b32.xlu0 %v200, 25
        %v222 = vpop.permute.xlu0 %221
        %vm225 = vcmask 335048
        %226 = vst.msk [vmem:[#allocation2 + $0x3] sm:$0xff] %vm225, %v220
        %227 = vst.msk [vmem:[#allocation2 + $0xb] sm:$0xff] %vm225, %v222
        %v228 = vld [vmem:[#allocation2] sm:$0xff]
        %v229 = vld [vmem:[#allocation2 + $0x8] sm:$0xff]
        %v230 = vld [vmem:[#allocation2 + $0x10] sm:$0x3f]
        %v231 = vld [vmem:[%s1] sm:$0x1]
        %v232 = vlaneseq
        %v233 = vshrl.u32 %v232, 7
        %v234 = vsub.s32 0, %v233
        %v235 = vrot.slane %v231, %v234
        %v236 = vmul.f32 %v235, %v228
        %v237 = vmul.f32 %v235, %v229
        %v238 = vadd.f32 %v236, 0.0
        %v239 = vadd.f32 %v237, 0.0
        %v240 = vld [vmem:[%s1 + $0x7] sm:$0x1]
        %v241 = vlaneseq
        %v242 = vshrl.u32 %v241, 7
        %v243 = vsub.s32 0, %v242
        %v244 = vrot.slane %v240, %v243
        %v245 = vmul.f32 %v244, %v228
        %v246 = vmul.f32 %v244, %v229
        %v247 = vmul.f32 %v244, %v230
        %vm251 = vcmask 1046528
        %v252 = vrot.slane %v245, 1
        %v253 = vrot.slane %v246, 1
        %v254 = vsel %vm251, %v252, %v253
        %v255 = vrot.slane %v247, 1
        %v256 = vsel %vm251, %v253, %v255
        %v259 = vadd.f32 %v238, %v254
        %v260 = vadd.f32 %v239, %v256
        %v261 = vld [vmem:[%s1 + $0xe] sm:$0x1]
        %v262 = vlaneseq
        %v263 = vshrl.u32 %v262, 7
        %v264 = vsub.s32 0, %v263
        %v265 = vrot.slane %v261, %v264
        %v266 = vmul.f32 %v265, %v228
        %v267 = vmul.f32 %v265, %v229
        %v268 = vmul.f32 %v265, %v230
        %vm272 = vcmask 1045504
        %v273 = vrot.slane %v266, 2
        %v274 = vrot.slane %v267, 2
        %v275 = vsel %vm272, %v273, %v274
        %v276 = vrot.slane %v268, 2
        %v277 = vsel %vm272, %v274, %v276
        %v280 = vadd.f32 %v259, %v275
        %v281 = vadd.f32 %v260, %v277
        %v282 = vld [vmem:[%s1 + $0x15] sm:$0x1]
        %v283 = vlaneseq
        %v284 = vshrl.u32 %v283, 7
        %v285 = vsub.s32 0, %v284
        %v286 = vrot.slane %v282, %v285
        %v287 = vmul.f32 %v286, %v228
        %v288 = vmul.f32 %v286, %v229
        %v289 = vmul.f32 %v286, %v230
        %vm293 = vcmask 1044480
        %v294 = vrot.slane %v287, 3
        %v295 = vrot.slane %v288, 3
        %v296 = vsel %vm293, %v294, %v295
        %v297 = vrot.slane %v289, 3
        %v298 = vsel %vm293, %v295, %v297
        %v301 = vadd.f32 %v280, %v296
        %v302 = vadd.f32 %v281, %v298
        %v303 = vld [vmem:[%s1 + $0x1c] sm:$0x1]
        %v304 = vlaneseq
        %v305 = vshrl.u32 %v304, 7
        %v306 = vsub.s32 0, %v305
        %v307 = vrot.slane %v303, %v306
        %v308 = vmul.f32 %v307, %v228
        %v309 = vmul.f32 %v307, %v229
        %v310 = vmul.f32 %v307, %v230
        %vm314 = vcmask 1043456
        %v315 = vrot.slane %v308, 4
        %v316 = vrot.slane %v309, 4
        %v317 = vsel %vm314, %v315, %v316
        %v318 = vrot.slane %v310, 4
        %v319 = vsel %vm314, %v316, %v318
        %v322 = vadd.f32 %v301, %v317
        %v323 = vadd.f32 %v302, %v319
        %v324 = vld [vmem:[%s1 + $0x23] sm:$0x1]
        %v325 = vlaneseq
        %v326 = vshrl.u32 %v325, 7
        %v327 = vsub.s32 0, %v326
        %v328 = vrot.slane %v324, %v327
        %v329 = vmul.f32 %v328, %v228
        %v330 = vmul.f32 %v328, %v229
        %v331 = vmul.f32 %v328, %v230
        %vm335 = vcmask 1042432
        %v336 = vrot.slane %v329, 5
        %v337 = vrot.slane %v330, 5
        %v338 = vsel %vm335, %v336, %v337
        %v339 = vrot.slane %v331, 5
        %v340 = vsel %vm335, %v337, %v339
        %v343 = vadd.f32 %v322, %v338
        %v344 = vadd.f32 %v323, %v340
        %v345 = vld [vmem:[%s1 + $0x2a] sm:$0x1]
        %v346 = vlaneseq
        %v347 = vshrl.u32 %v346, 7
        %v348 = vsub.s32 0, %v347
        %v349 = vrot.slane %v345, %v348
        %v350 = vmul.f32 %v349, %v228
        %v351 = vmul.f32 %v349, %v229
        %v352 = vmul.f32 %v349, %v230
        %vm356 = vcmask 1041408
        %v357 = vrot.slane %v350, 6
        %v358 = vrot.slane %v351, 6
        %v359 = vsel %vm356, %v357, %v358
        %v360 = vrot.slane %v352, 6
        %v361 = vsel %vm356, %v358, %v360
        %v364 = vadd.f32 %v343, %v359
        %v365 = vadd.f32 %v344, %v361
        %v366 = vld [vmem:[%s1 + $0x1] sm:$0x1]
        %v367 = vlaneseq
        %v368 = vshrl.u32 %v367, 7
        %v369 = vsub.s32 0, %v368
        %v370 = vrot.slane %v366, %v369
        %373 = vrot.lane.b32.xlu0 %v228, 127
        %v374 = vpop.permute.xlu0 %373
        %375 = vrot.lane.b32.xlu0 %v229, 127
        %v376 = vpop.permute.xlu0 %375
        %v379 = vmul.f32 %v370, %v374
        %v380 = vmul.f32 %v370, %v376
        %v381 = vadd.f32 %v364, %v379
        %v382 = vadd.f32 %v365, %v380
        %v383 = vld [vmem:[%s1 + $0x8] sm:$0x1]
        %v384 = vlaneseq
        %v385 = vshrl.u32 %v384, 7
        %v386 = vsub.s32 0, %v385
        %v387 = vrot.slane %v383, %v386
        %v389 = vrot.slane %v228, 1
        %v390 = vrot.slane %v229, 1
        %v391 = vsel %vm251, %v389, %v390
        %v392 = vrot.slane %v230, 1
        %v393 = vsel %vm251, %v390, %v392
        %394 = vrot.lane.b32.xlu0 %v391, 127
        %v395 = vpop.permute.xlu0 %394
        %396 = vrot.lane.b32.xlu0 %v393, 127
        %v397 = vpop.permute.xlu0 %396
        %v400 = vmul.f32 %v387, %v395
        %v401 = vmul.f32 %v387, %v397
        %v402 = vadd.f32 %v381, %v400
        %v403 = vadd.f32 %v382, %v401
        %v404 = vld [vmem:[%s1 + $0xf] sm:$0x1]
        %v405 = vlaneseq
        %v406 = vshrl.u32 %v405, 7
        %v407 = vsub.s32 0, %v406
        %v408 = vrot.slane %v404, %v407
        %v409 = vrot.slane %v228, 2
        %v410 = vrot.slane %v229, 2
        %v411 = vsel %vm272, %v409, %v410
        %v412 = vrot.slane %v230, 2
        %v413 = vsel %vm272, %v410, %v412
        %414 = vrot.lane.b32.xlu0 %v411, 127
        %v415 = vpop.permute.xlu0 %414
        %416 = vrot.lane.b32.xlu0 %v413, 127
        %v417 = vpop.permute.xlu0 %416
        %v420 = vmul.f32 %v408, %v415
        %v421 = vmul.f32 %v408, %v417
        %v422 = vadd.f32 %v402, %v420
        %v423 = vadd.f32 %v403, %v421
        %v424 = vld [vmem:[%s1 + $0x16] sm:$0x1]
        %v425 = vlaneseq
        %v426 = vshrl.u32 %v425, 7
        %v427 = vsub.s32 0, %v426
        %v428 = vrot.slane %v424, %v427
        %v429 = vrot.slane %v228, 3
        %v430 = vrot.slane %v229, 3
        %v431 = vsel %vm293, %v429, %v430
        %v432 = vrot.slane %v230, 3
        %v433 = vsel %vm293, %v430, %v432
        %434 = vrot.lane.b32.xlu0 %v431, 127
        %v435 = vpop.permute.xlu0 %434
        %436 = vrot.lane.b32.xlu0 %v433, 127
        %v437 = vpop.permute.xlu0 %436
        %v440 = vmul.f32 %v428, %v435
        %v441 = vmul.f32 %v428, %v437
        %v442 = vadd.f32 %v422, %v440
        %v443 = vadd.f32 %v423, %v441
        %v444 = vld [vmem:[%s1 + $0x1d] sm:$0x1]
        %v445 = vlaneseq
        %v446 = vshrl.u32 %v445, 7
        %v447 = vsub.s32 0, %v446
        %v448 = vrot.slane %v444, %v447
        %v449 = vrot.slane %v228, 4
        %v450 = vrot.slane %v229, 4
        %v451 = vsel %vm314, %v449, %v450
        %v452 = vrot.slane %v230, 4
        %v453 = vsel %vm314, %v450, %v452
        %454 = vrot.lane.b32.xlu0 %v451, 127
        %v455 = vpop.permute.xlu0 %454
        %456 = vrot.lane.b32.xlu0 %v453, 127
        %v457 = vpop.permute.xlu0 %456
        %v460 = vmul.f32 %v448, %v455
        %v461 = vmul.f32 %v448, %v457
        %v462 = vadd.f32 %v442, %v460
        %v463 = vadd.f32 %v443, %v461
        %v464 = vld [vmem:[%s1 + $0x24] sm:$0x1]
        %v465 = vlaneseq
        %v466 = vshrl.u32 %v465, 7
        %v467 = vsub.s32 0, %v466
        %v468 = vrot.slane %v464, %v467
        %v469 = vrot.slane %v228, 5
        %v470 = vrot.slane %v229, 5
        %v471 = vsel %vm335, %v469, %v470
        %v472 = vrot.slane %v230, 5
        %v473 = vsel %vm335, %v470, %v472
        %474 = vrot.lane.b32.xlu0 %v471, 127
        %v475 = vpop.permute.xlu0 %474
        %476 = vrot.lane.b32.xlu0 %v473, 127
        %v477 = vpop.permute.xlu0 %476
        %v480 = vmul.f32 %v468, %v475
        %v481 = vmul.f32 %v468, %v477
        %v482 = vadd.f32 %v462, %v480
        %v483 = vadd.f32 %v463, %v481
        %v484 = vld [vmem:[%s1 + $0x2b] sm:$0x1]
        %v485 = vlaneseq
        %v486 = vshrl.u32 %v485, 7
        %v487 = vsub.s32 0, %v486
        %v488 = vrot.slane %v484, %v487
        %v489 = vrot.slane %v228, 6
        %v490 = vrot.slane %v229, 6
        %v491 = vsel %vm356, %v489, %v490
        %v492 = vrot.slane %v230, 6
        %v493 = vsel %vm356, %v490, %v492
        %494 = vrot.lane.b32.xlu0 %v491, 127
        %v495 = vpop.permute.xlu0 %494
        %496 = vrot.lane.b32.xlu0 %v493, 127
        %v497 = vpop.permute.xlu0 %496
        %v500 = vmul.f32 %v488, %v495
        %v501 = vmul.f32 %v488, %v497
        %v502 = vadd.f32 %v482, %v500
        %v503 = vadd.f32 %v483, %v501
        %v504 = vld [vmem:[%s1 + $0x2] sm:$0x1]
        %v505 = vlaneseq
        %v506 = vshrl.u32 %v505, 7
        %v507 = vsub.s32 0, %v506
        %v508 = vrot.slane %v504, %v507
        %509 = vrot.lane.b32.xlu0 %v228, 126
        %v510 = vpop.permute.xlu0 %509
        %511 = vrot.lane.b32.xlu0 %v229, 126
        %v512 = vpop.permute.xlu0 %511
        %v515 = vmul.f32 %v508, %v510
        %v516 = vmul.f32 %v508, %v512
        %v517 = vadd.f32 %v502, %v515
        %v518 = vadd.f32 %v503, %v516
        %v519 = vld [vmem:[%s1 + $0x9] sm:$0x1]
        %v520 = vlaneseq
        %v521 = vshrl.u32 %v520, 7
        %v522 = vsub.s32 0, %v521
        %v523 = vrot.slane %v519, %v522
        %524 = vrot.lane.b32.xlu0 %v391, 126
        %v525 = vpop.permute.xlu0 %524
        %526 = vrot.lane.b32.xlu0 %v393, 126
        %v527 = vpop.permute.xlu0 %526
        %v530 = vmul.f32 %v523, %v525
        %v531 = vmul.f32 %v523, %v527
        %v532 = vadd.f32 %v517, %v530
        %v533 = vadd.f32 %v518, %v531
        %v534 = vld [vmem:[%s1 + $0x10] sm:$0x1]
        %v535 = vlaneseq
        %v536 = vshrl.u32 %v535, 7
        %v537 = vsub.s32 0, %v536
        %v538 = vrot.slane %v534, %v537
        %539 = vrot.lane.b32.xlu0 %v411, 126
        %v540 = vpop.permute.xlu0 %539
        %541 = vrot.lane.b32.xlu0 %v413, 126
        %v542 = vpop.permute.xlu0 %541
        %v545 = vmul.f32 %v538, %v540
        %v546 = vmul.f32 %v538, %v542
        %v547 = vadd.f32 %v532, %v545
        %v548 = vadd.f32 %v533, %v546
        %v549 = vld [vmem:[%s1 + $0x17] sm:$0x1]
        %v550 = vlaneseq
        %v551 = vshrl.u32 %v550, 7
        %v552 = vsub.s32 0, %v551
        %v553 = vrot.slane %v549, %v552
        %554 = vrot.lane.b32.xlu0 %v431, 126
        %v555 = vpop.permute.xlu0 %554
        %556 = vrot.lane.b32.xlu0 %v433, 126
        %v557 = vpop.permute.xlu0 %556
        %v560 = vmul.f32 %v553, %v555
        %v561 = vmul.f32 %v553, %v557
        %v562 = vadd.f32 %v547, %v560
        %v563 = vadd.f32 %v548, %v561
        %v564 = vld [vmem:[%s1 + $0x1e] sm:$0x1]
        %v565 = vlaneseq
        %v566 = vshrl.u32 %v565, 7
        %v567 = vsub.s32 0, %v566
        %v568 = vrot.slane %v564, %v567
        %569 = vrot.lane.b32.xlu0 %v451, 126
        %v570 = vpop.permute.xlu0 %569
        %571 = vrot.lane.b32.xlu0 %v453, 126
        %v572 = vpop.permute.xlu0 %571
        %v575 = vmul.f32 %v568, %v570
        %v576 = vmul.f32 %v568, %v572
        %v577 = vadd.f32 %v562, %v575
        %v578 = vadd.f32 %v563, %v576
        %v579 = vld [vmem:[%s1 + $0x25] sm:$0x1]
        %v580 = vlaneseq
        %v581 = vshrl.u32 %v580, 7
        %v582 = vsub.s32 0, %v581
        %v583 = vrot.slane %v579, %v582
        %584 = vrot.lane.b32.xlu0 %v471, 126
        %v585 = vpop.permute.xlu0 %584
        %586 = vrot.lane.b32.xlu0 %v473, 126
        %v587 = vpop.permute.xlu0 %586
        %v590 = vmul.f32 %v583, %v585
        %v591 = vmul.f32 %v583, %v587
        %v592 = vadd.f32 %v577, %v590
        %v593 = vadd.f32 %v578, %v591
        %v594 = vld [vmem:[%s1 + $0x2c] sm:$0x1]
        %v595 = vlaneseq
        %v596 = vshrl.u32 %v595, 7
        %v597 = vsub.s32 0, %v596
        %v598 = vrot.slane %v594, %v597
        %599 = vrot.lane.b32.xlu0 %v491, 126
        %v600 = vpop.permute.xlu0 %599
        %601 = vrot.lane.b32.xlu0 %v493, 126
        %v602 = vpop.permute.xlu0 %601
        %v605 = vmul.f32 %v598, %v600
        %v606 = vmul.f32 %v598, %v602
        %v607 = vadd.f32 %v592, %v605
        %v608 = vadd.f32 %v593, %v606
        %v609 = vld [vmem:[%s1 + $0x3] sm:$0x1]
        %v610 = vlaneseq
        %v611 = vshrl.u32 %v610, 7
        %v612 = vsub.s32 0, %v611
        %v613 = vrot.slane %v609, %v612
        %614 = vrot.lane.b32.xlu0 %v228, 125
        %v615 = vpop.permute.xlu0 %614
        %616 = vrot.lane.b32.xlu0 %v229, 125
        %v617 = vpop.permute.xlu0 %616
        %v620 = vmul.f32 %v613, %v615
        %v621 = vmul.f32 %v613, %v617
        %v622 = vadd.f32 %v607, %v620
        %v623 = vadd.f32 %v608, %v621
        %v624 = vld [vmem:[%s1 + $0xa] sm:$0x1]
        %v625 = vlaneseq
        %v626 = vshrl.u32 %v625, 7
        %v627 = vsub.s32 0, %v626
        %v628 = vrot.slane %v624, %v627
        %629 = vrot.lane.b32.xlu0 %v391, 125
        %v630 = vpop.permute.xlu0 %629
        %631 = vrot.lane.b32.xlu0 %v393, 125
        %v632 = vpop.permute.xlu0 %631
        %v635 = vmul.f32 %v628, %v630
        %v636 = vmul.f32 %v628, %v632
        %v637 = vadd.f32 %v622, %v635
        %v638 = vadd.f32 %v623, %v636
        %v639 = vld [vmem:[%s1 + $0x11] sm:$0x1]
        %v640 = vlaneseq
        %v641 = vshrl.u32 %v640, 7
        %v642 = vsub.s32 0, %v641
        %v643 = vrot.slane %v639, %v642
        %644 = vrot.lane.b32.xlu0 %v411, 125
        %v645 = vpop.permute.xlu0 %644
        %646 = vrot.lane.b32.xlu0 %v413, 125
        %v647 = vpop.permute.xlu0 %646
        %v650 = vmul.f32 %v643, %v645
        %v651 = vmul.f32 %v643, %v647
        %v652 = vadd.f32 %v637, %v650
        %v653 = vadd.f32 %v638, %v651
        %v654 = vld [vmem:[%s1 + $0x18] sm:$0x1]
        %v655 = vlaneseq
        %v656 = vshrl.u32 %v655, 7
        %v657 = vsub.s32 0, %v656
        %v658 = vrot.slane %v654, %v657
        %659 = vrot.lane.b32.xlu0 %v431, 125
        %v660 = vpop.permute.xlu0 %659
        %661 = vrot.lane.b32.xlu0 %v433, 125
        %v662 = vpop.permute.xlu0 %661
        %v665 = vmul.f32 %v658, %v660
        %v666 = vmul.f32 %v658, %v662
        %v667 = vadd.f32 %v652, %v665
        %v668 = vadd.f32 %v653, %v666
        %v669 = vld [vmem:[%s1 + $0x1f] sm:$0x1]
        %v670 = vlaneseq
        %v671 = vshrl.u32 %v670, 7
        %v672 = vsub.s32 0, %v671
        %v673 = vrot.slane %v669, %v672
        %674 = vrot.lane.b32.xlu0 %v451, 125
        %v675 = vpop.permute.xlu0 %674
        %676 = vrot.lane.b32.xlu0 %v453, 125
        %v677 = vpop.permute.xlu0 %676
        %v680 = vmul.f32 %v673, %v675
        %v681 = vmul.f32 %v673, %v677
        %v682 = vadd.f32 %v667, %v680
        %v683 = vadd.f32 %v668, %v681
        %v684 = vld [vmem:[%s1 + $0x26] sm:$0x1]
        %v685 = vlaneseq
        %v686 = vshrl.u32 %v685, 7
        %v687 = vsub.s32 0, %v686
        %v688 = vrot.slane %v684, %v687
        %689 = vrot.lane.b32.xlu0 %v471, 125
        %v690 = vpop.permute.xlu0 %689
        %691 = vrot.lane.b32.xlu0 %v473, 125
        %v692 = vpop.permute.xlu0 %691
        %v695 = vmul.f32 %v688, %v690
        %v696 = vmul.f32 %v688, %v692
        %v697 = vadd.f32 %v682, %v695
        %v698 = vadd.f32 %v683, %v696
        %v699 = vld [vmem:[%s1 + $0x2d] sm:$0x1]
        %v700 = vlaneseq
        %v701 = vshrl.u32 %v700, 7
        %v702 = vsub.s32 0, %v701
        %v703 = vrot.slane %v699, %v702
        %704 = vrot.lane.b32.xlu0 %v491, 125
        %v705 = vpop.permute.xlu0 %704
        %706 = vrot.lane.b32.xlu0 %v493, 125
        %v707 = vpop.permute.xlu0 %706
        %v710 = vmul.f32 %v703, %v705
        %v711 = vmul.f32 %v703, %v707
        %v712 = vadd.f32 %v697, %v710
        %v713 = vadd.f32 %v698, %v711
        %v714 = vld [vmem:[%s1 + $0x4] sm:$0x1]
        %v715 = vlaneseq
        %v716 = vshrl.u32 %v715, 7
        %v717 = vsub.s32 0, %v716
        %v718 = vrot.slane %v714, %v717
        %719 = vrot.lane.b32.xlu0 %v228, 124
        %v720 = vpop.permute.xlu0 %719
        %721 = vrot.lane.b32.xlu0 %v229, 124
        %v722 = vpop.permute.xlu0 %721
        %v725 = vmul.f32 %v718, %v720
        %v726 = vmul.f32 %v718, %v722
        %v727 = vadd.f32 %v712, %v725
        %v728 = vadd.f32 %v713, %v726
        %v729 = vld [vmem:[%s1 + $0xb] sm:$0x1]
        %v730 = vlaneseq
        %v731 = vshrl.u32 %v730, 7
        %v732 = vsub.s32 0, %v731
        %v733 = vrot.slane %v729, %v732
        %734 = vrot.lane.b32.xlu0 %v391, 124
        %v735 = vpop.permute.xlu0 %734
        %736 = vrot.lane.b32.xlu0 %v393, 124
        %v737 = vpop.permute.xlu0 %736
        %v740 = vmul.f32 %v733, %v735
        %v741 = vmul.f32 %v733, %v737
        %v742 = vadd.f32 %v727, %v740
        %v743 = vadd.f32 %v728, %v741
        %v744 = vld [vmem:[%s1 + $0x12] sm:$0x1]
        %v745 = vlaneseq
        %v746 = vshrl.u32 %v745, 7
        %v747 = vsub.s32 0, %v746
        %v748 = vrot.slane %v744, %v747
        %749 = vrot.lane.b32.xlu0 %v411, 124
        %v750 = vpop.permute.xlu0 %749
        %751 = vrot.lane.b32.xlu0 %v413, 124
        %v752 = vpop.permute.xlu0 %751
        %v755 = vmul.f32 %v748, %v750
        %v756 = vmul.f32 %v748, %v752
        %v757 = vadd.f32 %v742, %v755
        %v758 = vadd.f32 %v743, %v756
        %v759 = vld [vmem:[%s1 + $0x19] sm:$0x1]
        %v760 = vlaneseq
        %v761 = vshrl.u32 %v760, 7
        %v762 = vsub.s32 0, %v761
        %v763 = vrot.slane %v759, %v762
        %764 = vrot.lane.b32.xlu0 %v431, 124
        %v765 = vpop.permute.xlu0 %764
        %766 = vrot.lane.b32.xlu0 %v433, 124
        %v767 = vpop.permute.xlu0 %766
        %v770 = vmul.f32 %v763, %v765
        %v771 = vmul.f32 %v763, %v767
        %v772 = vadd.f32 %v757, %v770
        %v773 = vadd.f32 %v758, %v771
        %v774 = vld [vmem:[%s1 + $0x20] sm:$0x1]
        %v775 = vlaneseq
        %v776 = vshrl.u32 %v775, 7
        %v777 = vsub.s32 0, %v776
        %v778 = vrot.slane %v774, %v777
        %779 = vrot.lane.b32.xlu0 %v451, 124
        %v780 = vpop.permute.xlu0 %779
        %781 = vrot.lane.b32.xlu0 %v453, 124
        %v782 = vpop.permute.xlu0 %781
        %v785 = vmul.f32 %v778, %v780
        %v786 = vmul.f32 %v778, %v782
        %v787 = vadd.f32 %v772, %v785
        %v788 = vadd.f32 %v773, %v786
        %v789 = vld [vmem:[%s1 + $0x27] sm:$0x1]
        %v790 = vlaneseq
        %v791 = vshrl.u32 %v790, 7
        %v792 = vsub.s32 0, %v791
        %v793 = vrot.slane %v789, %v792
        %794 = vrot.lane.b32.xlu0 %v471, 124
        %v795 = vpop.permute.xlu0 %794
        %796 = vrot.lane.b32.xlu0 %v473, 124
        %v797 = vpop.permute.xlu0 %796
        %v800 = vmul.f32 %v793, %v795
        %v801 = vmul.f32 %v793, %v797
        %v802 = vadd.f32 %v787, %v800
        %v803 = vadd.f32 %v788, %v801
        %v804 = vld [vmem:[%s1 + $0x2e] sm:$0x1]
        %v805 = vlaneseq
        %v806 = vshrl.u32 %v805, 7
        %v807 = vsub.s32 0, %v806
        %v808 = vrot.slane %v804, %v807
        %809 = vrot.lane.b32.xlu0 %v491, 124
        %v810 = vpop.permute.xlu0 %809
        %811 = vrot.lane.b32.xlu0 %v493, 124
        %v812 = vpop.permute.xlu0 %811
        %v815 = vmul.f32 %v808, %v810
        %v816 = vmul.f32 %v808, %v812
        %v817 = vadd.f32 %v802, %v815
        %v818 = vadd.f32 %v803, %v816
        %v819 = vld [vmem:[%s1 + $0x5] sm:$0x1]
        %v820 = vlaneseq
        %v821 = vshrl.u32 %v820, 7
        %v822 = vsub.s32 0, %v821
        %v823 = vrot.slane %v819, %v822
        %824 = vrot.lane.b32.xlu0 %v228, 123
        %v825 = vpop.permute.xlu0 %824
        %826 = vrot.lane.b32.xlu0 %v229, 123
        %v827 = vpop.permute.xlu0 %826
        %v830 = vmul.f32 %v823, %v825
        %v831 = vmul.f32 %v823, %v827
        %v832 = vadd.f32 %v817, %v830
        %v833 = vadd.f32 %v818, %v831
        %v834 = vld [vmem:[%s1 + $0xc] sm:$0x1]
        %v835 = vlaneseq
        %v836 = vshrl.u32 %v835, 7
        %v837 = vsub.s32 0, %v836
        %v838 = vrot.slane %v834, %v837
        %839 = vrot.lane.b32.xlu0 %v391, 123
        %v840 = vpop.permute.xlu0 %839
        %841 = vrot.lane.b32.xlu0 %v393, 123
        %v842 = vpop.permute.xlu0 %841
        %v845 = vmul.f32 %v838, %v840
        %v846 = vmul.f32 %v838, %v842
        %v847 = vadd.f32 %v832, %v845
        %v848 = vadd.f32 %v833, %v846
        %v849 = vld [vmem:[%s1 + $0x13] sm:$0x1]
        %v850 = vlaneseq
        %v851 = vshrl.u32 %v850, 7
        %v852 = vsub.s32 0, %v851
        %v853 = vrot.slane %v849, %v852
        %854 = vrot.lane.b32.xlu0 %v411, 123
        %v855 = vpop.permute.xlu0 %854
        %856 = vrot.lane.b32.xlu0 %v413, 123
        %v857 = vpop.permute.xlu0 %856
        %v860 = vmul.f32 %v853, %v855
        %v861 = vmul.f32 %v853, %v857
        %v862 = vadd.f32 %v847, %v860
        %v863 = vadd.f32 %v848, %v861
        %v864 = vld [vmem:[%s1 + $0x1a] sm:$0x1]
        %v865 = vlaneseq
        %v866 = vshrl.u32 %v865, 7
        %v867 = vsub.s32 0, %v866
        %v868 = vrot.slane %v864, %v867
        %869 = vrot.lane.b32.xlu0 %v431, 123
        %v870 = vpop.permute.xlu0 %869
        %871 = vrot.lane.b32.xlu0 %v433, 123
        %v872 = vpop.permute.xlu0 %871
        %v875 = vmul.f32 %v868, %v870
        %v876 = vmul.f32 %v868, %v872
        %v877 = vadd.f32 %v862, %v875
        %v878 = vadd.f32 %v863, %v876
        %v879 = vld [vmem:[%s1 + $0x21] sm:$0x1]
        %v880 = vlaneseq
        %v881 = vshrl.u32 %v880, 7
        %v882 = vsub.s32 0, %v881
        %v883 = vrot.slane %v879, %v882
        %884 = vrot.lane.b32.xlu0 %v451, 123
        %v885 = vpop.permute.xlu0 %884
        %886 = vrot.lane.b32.xlu0 %v453, 123
        %v887 = vpop.permute.xlu0 %886
        %v890 = vmul.f32 %v883, %v885
        %v891 = vmul.f32 %v883, %v887
        %v892 = vadd.f32 %v877, %v890
        %v893 = vadd.f32 %v878, %v891
        %v894 = vld [vmem:[%s1 + $0x28] sm:$0x1]
        %v895 = vlaneseq
        %v896 = vshrl.u32 %v895, 7
        %v897 = vsub.s32 0, %v896
        %v898 = vrot.slane %v894, %v897
        %899 = vrot.lane.b32.xlu0 %v471, 123
        %v900 = vpop.permute.xlu0 %899
        %901 = vrot.lane.b32.xlu0 %v473, 123
        %v902 = vpop.permute.xlu0 %901
        %v905 = vmul.f32 %v898, %v900
        %v906 = vmul.f32 %v898, %v902
        %v907 = vadd.f32 %v892, %v905
        %v908 = vadd.f32 %v893, %v906
        %v909 = vld [vmem:[%s1 + $0x2f] sm:$0x1]
        %v910 = vlaneseq
        %v911 = vshrl.u32 %v910, 7
        %v912 = vsub.s32 0, %v911
        %v913 = vrot.slane %v909, %v912
        %914 = vrot.lane.b32.xlu0 %v491, 123
        %v915 = vpop.permute.xlu0 %914
        %916 = vrot.lane.b32.xlu0 %v493, 123
        %v917 = vpop.permute.xlu0 %916
        %v920 = vmul.f32 %v913, %v915
        %v921 = vmul.f32 %v913, %v917
        %v922 = vadd.f32 %v907, %v920
        %v923 = vadd.f32 %v908, %v921
        %v924 = vld [vmem:[%s1 + $0x6] sm:$0x1]
        %v925 = vlaneseq
        %v926 = vshrl.u32 %v925, 7
        %v927 = vsub.s32 0, %v926
        %v928 = vrot.slane %v924, %v927
        %929 = vrot.lane.b32.xlu0 %v228, 122
        %v930 = vpop.permute.xlu0 %929
        %931 = vrot.lane.b32.xlu0 %v229, 122
        %v932 = vpop.permute.xlu0 %931
        %v935 = vmul.f32 %v928, %v930
        %v936 = vmul.f32 %v928, %v932
        %v937 = vadd.f32 %v922, %v935
        %v938 = vadd.f32 %v923, %v936
        %v939 = vld [vmem:[%s1 + $0xd] sm:$0x1]
        %v940 = vlaneseq
        %v941 = vshrl.u32 %v940, 7
        %v942 = vsub.s32 0, %v941
        %v943 = vrot.slane %v939, %v942
        %944 = vrot.lane.b32.xlu0 %v391, 122
        %v945 = vpop.permute.xlu0 %944
        %946 = vrot.lane.b32.xlu0 %v393, 122
        %v947 = vpop.permute.xlu0 %946
        %v950 = vmul.f32 %v943, %v945
        %v951 = vmul.f32 %v943, %v947
        %v952 = vadd.f32 %v937, %v950
        %v953 = vadd.f32 %v938, %v951
        %v954 = vld [vmem:[%s1 + $0x14] sm:$0x1]
        %v955 = vlaneseq
        %v956 = vshrl.u32 %v955, 7
        %v957 = vsub.s32 0, %v956
        %v958 = vrot.slane %v954, %v957
        %959 = vrot.lane.b32.xlu0 %v411, 122
        %v960 = vpop.permute.xlu0 %959
        %961 = vrot.lane.b32.xlu0 %v413, 122
        %v962 = vpop.permute.xlu0 %961
        %v965 = vmul.f32 %v958, %v960
        %v966 = vmul.f32 %v958, %v962
        %v967 = vadd.f32 %v952, %v965
        %v968 = vadd.f32 %v953, %v966
        %v969 = vld [vmem:[%s1 + $0x1b] sm:$0x1]
        %v970 = vlaneseq
        %v971 = vshrl.u32 %v970, 7
        %v972 = vsub.s32 0, %v971
        %v973 = vrot.slane %v969, %v972
        %974 = vrot.lane.b32.xlu0 %v431, 122
        %v975 = vpop.permute.xlu0 %974
        %976 = vrot.lane.b32.xlu0 %v433, 122
        %v977 = vpop.permute.xlu0 %976
        %v980 = vmul.f32 %v973, %v975
        %v981 = vmul.f32 %v973, %v977
        %v982 = vadd.f32 %v967, %v980
        %v983 = vadd.f32 %v968, %v981
        %v984 = vld [vmem:[%s1 + $0x22] sm:$0x1]
        %v985 = vlaneseq
        %v986 = vshrl.u32 %v985, 7
        %v987 = vsub.s32 0, %v986
        %v988 = vrot.slane %v984, %v987
        %989 = vrot.lane.b32.xlu0 %v451, 122
        %v990 = vpop.permute.xlu0 %989
        %991 = vrot.lane.b32.xlu0 %v453, 122
        %v992 = vpop.permute.xlu0 %991
        %v995 = vmul.f32 %v988, %v990
        %v996 = vmul.f32 %v988, %v992
        %v997 = vadd.f32 %v982, %v995
        %v998 = vadd.f32 %v983, %v996
        %v999 = vld [vmem:[%s1 + $0x29] sm:$0x1]
        %v1000 = vlaneseq
        %v1001 = vshrl.u32 %v1000, 7
        %v1002 = vsub.s32 0, %v1001
        %v1003 = vrot.slane %v999, %v1002
        %1004 = vrot.lane.b32.xlu0 %v471, 122
        %v1005 = vpop.permute.xlu0 %1004
        %1006 = vrot.lane.b32.xlu0 %v473, 122
        %v1007 = vpop.permute.xlu0 %1006
        %v1010 = vmul.f32 %v1003, %v1005
        %v1011 = vmul.f32 %v1003, %v1007
        %v1012 = vadd.f32 %v997, %v1010
        %v1013 = vadd.f32 %v998, %v1011
        %v1014 = vld [vmem:[%s1 + $0x30] sm:$0x1]
        %v1015 = vlaneseq
        %v1016 = vshrl.u32 %v1015, 7
        %v1017 = vsub.s32 0, %v1016
        %v1018 = vrot.slane %v1014, %v1017
        %1019 = vrot.lane.b32.xlu0 %v491, 122
        %v1020 = vpop.permute.xlu0 %1019
        %1021 = vrot.lane.b32.xlu0 %v493, 122
        %v1022 = vpop.permute.xlu0 %1021
        %v1025 = vmul.f32 %v1018, %v1020
        %v1026 = vmul.f32 %v1018, %v1022
        %v1027 = vadd.f32 %v1012, %v1025
        %v1028 = vadd.f32 %v1013, %v1026
        %1031 = vrot.lane.b32.xlu0 %v1027, 106
        %v1032 = vpop.permute.xlu0 %1031
        %1033 = vrot.lane.b32.xlu0 %v1028, 106
        %v1034 = vpop.permute.xlu0 %1033
        %v1037 = vadd.f32 %v1027, %v1032
        %v1038 = vadd.f32 %v1028, %v1034
        %v1039 = vxor.u32 %v1037, 2147483648
        %v1040 = vxor.u32 %v1038, 2147483648
        %v1041 = vmul.f32 %v1039, 1.442695
        %v1042 = vpow.pop %v1041
        %v1043 = vmul.f32 %v1040, 1.442695
        %v1044 = vpow.pop %v1043
        %v1045 = vadd.f32 %v1042, 1.0
        %v1046 = vadd.f32 %v1044, 1.0
        %v1047 = vrcp.pop %v1045
        %v1048 = vmul.f32 1.0, %v1047
        %v1049 = vrcp.pop %v1046
        %v1050 = vmul.f32 1.0, %v1049
        %1051 = vst.msk [vmem:[%s161] sm:$0xff] %vm170, %v1048
        %1052 = vst.msk [vmem:[%s161 + $0x8] sm:$0xff] %vm170, %v1050
        %s1053 = sand.u32 %s74, 1
        %s1054 = scalar_lea.sflag [#allocation5], %s1053
        %s1055 = sand.u32 %s74, 1
        %s1056 = smul.addr %s1055, 16
        %s1057 = scalar_lea.vmem [#allocation6], %s1056
        // Predicated region
        $region33: #{tpu_custom_call.1} parent=27 // pred_check
          %p1058 = pneg %p84
        $region34: #{tpu_custom_call.1} parent=27 // pred_check_branch
          %1060 = sbr.rel (%p1058) target = $region36
        $region35: #{tpu_custom_call.1} parent=27 // pred_region
          %s1062 = ssub.s32 256, 256
          %1063 = vsyncadd %s1054, %s1062
          %s1064 = smul.addr %s19, 2
          %s1065 = smul.addr %s1064, 128
          %s1066 = scalar_lea.hbm %s2, %s1065
          %s1067 = sshll.u32 %s1057, 4
          %s1068 = int_to_ptr.vmem [resolvable:$true] %s1067
          %1073 = dma.vmem_to_hbm [thread:$0]  %s1068, 256, %s1066, %s1054, 128, 128, 8
        $region36: #{tpu_custom_call.1} parent=27 // pred_fallthru
          _
      $region28: #{tpu_custom_call.1} parent=5 // pred_fallthru
        _
      %p1074 = scmp.le.s32.totalorder 2, %s14
      // Predicated region
      $region37: #{tpu_custom_call.1} parent=5 // pred_check
        %p1075 = pneg %p1074
      $region38: #{tpu_custom_call.1} parent=5 // pred_check_branch
        %1077 = sbr.rel (%p1075) target = $region40
      $region39: #{tpu_custom_call.1} parent=5 // pred_region
        %s1078 = ssub.s32 %s14, 2
        // Predicated region
        $region41: #{tpu_custom_call.1} parent=39 // pred_check
          %p1079 = pneg %p90
        $region42: #{tpu_custom_call.1} parent=39 // pred_check_branch
          %1081 = sbr.rel (%p1079) target = $region44
        $region43: #{tpu_custom_call.1} parent=39 // pred_region
          %s1082 = sand.u32 %s75, 1
          %s1083 = scalar_lea.sflag [#allocation5], %s1082
          %s1084 = sand.u32 %s75, 1
          %s1085 = smul.addr %s1084, 16
          %s1086 = scalar_lea.vmem [#allocation6], %s1085
          %1087 = dma.done %s1083, 256
        $region44: #{tpu_custom_call.1} parent=39 // pred_fallthru
          _
      $region40: #{tpu_custom_call.1} parent=5 // pred_fallthru
        _
    $region6: #{tpu_custom_call.1} parent=1 // loop_footer
      %s18 = sadd.s32 1, %s14
    $region7: #{tpu_custom_call.1} parent=1 // loop_footer_branch
      %13 = sbr.rel target = $region3
    $region8: #{tpu_custom_call.1} parent=1 // loop_exit
      _
    %1088 = vsyncpa [#allocation4], 1
    %s1089 = scalar_lea.sflag [#allocation4], 1
    %1090 = vsyncpa %s1089, 1
    %1091 = vsyncpa [#allocation5], 1
    %s1092 = scalar_lea.sflag [#allocation5], 1
    %1093 = vsyncpa %s1092, 1

</llo_original>
